<compile_context>
chip_gen: v5e
topology: v5e:2x2
jax: 0.10.0
libtpu: 0.0.40
codegen_flags: <defaults>
</compile_context>

<pallas_src>
import math

import jax
import jax.numpy as jnp
from jax.experimental import pallas as pl
from jax.experimental.pallas import tpu as pltpu  # noqa: F401  (kept for TPU-specific tuning hooks)

INPUT_DIM = 16      # input_dim[-1]
FC_UNITS = 128      # torch default fc_units (already lane-dense)
LATENT_DIM = 8      # latent_dim
BLOCK_SIZE = 4      # cov_source / cov_target size (unused in forward)
BN_EPS = 1e-3       # BatchNorm1d(eps=0.001)
PAD = 128           # lane width: every feature dim is padded to this

N_BLOCKS = 9        # Linear + BN + ReLU blocks (5 encoder + 4 decoder)
N_LAYERS = 10       # + final decoder Linear


# ----------------------------- kernel ---------------------------------------
def ae_kernel(x_ref, w_ref, v_ref, out_ref):
    """x_ref:  (N, 128)      bf16  -- input rows, zero-padded past lane 16
       w_ref:  (10*128, 128) bf16  -- packed, zero-padded Linear weights
       v_ref:  (28, 128)     f32   -- rows [b,g,beta] x 9 blocks, then final bias
       out_ref:(N, 256)      f32   -- [:, :128] = y (16 real lanes),
                                      [:, 128:] = z ( 8 real lanes)."""

    def linear(h_bf16, layer):
        w = w_ref[layer * PAD:(layer + 1) * PAD, :]                 # static slice view
        return jnp.dot(h_bf16, w, preferred_element_type=jnp.float32)

    def bn_relu(pre, blk):
        bias = v_ref[3 * blk: 3 * blk + 1, :]
        gamma = v_ref[3 * blk + 1: 3 * blk + 2, :]
        beta = v_ref[3 * blk + 2: 3 * blk + 3, :]
        h = pre + bias
        mean = jnp.mean(h, axis=0, keepdims=True)
        var = jnp.mean(jnp.square(h - mean), axis=0, keepdims=True)
        scale = gamma * jax.lax.rsqrt(var + BN_EPS)    # rsqrt -> EUP slot
        shift = beta - mean * scale
        return jnp.maximum(h * scale + shift, 0.0)     # fused affine + ReLU

    h = x_ref[...]                                      # bf16 activations
    for blk in range(N_BLOCKS):
        hf = bn_relu(linear(h, blk), blk)               # f32
        if blk == 4:                                    # end of encoder -> latent z
            out_ref[:, PAD:2 * PAD] = hf
        h = hf.astype(jnp.bfloat16)

    final_bias = v_ref[3 * N_BLOCKS: 3 * N_BLOCKS + 1, :]
    out_ref[:, 0:PAD] = linear(h, N_BLOCKS) + final_bias


# ----------------------------- wrapper ---------------------------------------
@jax.jit
def autoencoder_forward(x, w_slab, v_slab):
    x2d = x.reshape(-1, INPUT_DIM)                      # torch: x.view(-1, input_dim)
    n = x2d.shape[0]
    x_pad = jnp.zeros((n, PAD), jnp.bfloat16).at[:, :INPUT_DIM].set(
        x2d.astype(jnp.bfloat16))
    out = pl.pallas_call(
        ae_kernel,
        out_shape=jax.ShapeDtypeStruct((n, 2 * PAD), jnp.float32),
    )(x_pad, w_slab, v_slab)
    y = out[:, :INPUT_DIM]
    z = out[:, PAD:PAD + LATENT_DIM]
    return y, z


# ---------------------- deterministic parameter init -------------------------
def init_params(key):
    """Returns the real-shaped (fan_in, fan_out) layers (for the reference) and
    the unused cov buffers (kept for parity with the torch module)."""
    dims = [
        # encoder Linear layers
        (INPUT_DIM, FC_UNITS), (FC_UNITS, FC_UNITS), (FC_UNITS, FC_UNITS),
        (FC_UNITS, FC_UNITS), (FC_UNITS, LATENT_DIM),
        # decoder Linear layers
        (LATENT_DIM, FC_UNITS), (FC_UNITS, FC_UNITS), (FC_UNITS, FC_UNITS),
        (FC_UNITS, FC_UNITS), (FC_UNITS, INPUT_DIM),
    ]
    keys = jax.random.split(key, 2 * len(dims))
    layers = []
    for i, (fi, fo) in enumerate(dims):
        bound = 1.0 / math.sqrt(fi)
        w = jax.random.uniform(keys[2 * i], (fi, fo), jnp.float32, -bound, bound)
        b = jax.random.uniform(keys[2 * i + 1], (fo,), jnp.float32, -bound, bound)
        layers.append((w, b))
    cov_source = jnp.zeros((BLOCK_SIZE, BLOCK_SIZE), jnp.float32)
    cov_target = jnp.zeros((BLOCK_SIZE, BLOCK_SIZE), jnp.float32)
    return layers, (cov_source, cov_target)


def pack_params(layers):
    """Pack all params into 2 contiguous, lane-dense slabs (2 input DMAs)."""
    w_rows, v_rows = [], []
    for i, (w, b) in enumerate(layers):
        fi, fo = w.shape
        w_rows.append(jnp.zeros((PAD, PAD), jnp.float32).at[:fi, :fo].set(w))
        b_pad = jnp.zeros((PAD,), jnp.float32).at[:fo].set(b)
        if i < N_BLOCKS:
            gamma = jnp.zeros((PAD,), jnp.float32).at[:fo].set(1.0)  # BN weight default
            beta = jnp.zeros((PAD,), jnp.float32)                    # BN bias default
            v_rows += [b_pad, gamma, beta]
        else:
            v_rows.append(b_pad)                                     # final Linear bias
    w_slab = jnp.concatenate(w_rows, axis=0).astype(jnp.bfloat16)    # (1280, 128)
    v_slab = jnp.stack(v_rows, axis=0)                               # (28, 128) f32
    return w_slab, v_slab


# ----------------------------- pure-JAX reference ----------------------------
def ref_forward(x, layers):
    """Reference with the same numerics as the kernel: bf16 matmul operands,
    f32 accumulation, f32 training-mode BN (gamma=1, beta=0) + ReLU."""
    h = x.reshape(-1, INPUT_DIM).astype(jnp.bfloat16)
    z = None
    for i, (w, b) in enumerate(layers[:N_BLOCKS]):
        pre = jnp.dot(h, w.astype(jnp.bfloat16),
                      preferred_element_type=jnp.float32) + b
        mean = jnp.mean(pre, axis=0, keepdims=True)
        var = jnp.mean(jnp.square(pre - mean), axis=0, keepdims=True)
        hf = jnp.maximum((pre - mean) * jax.lax.rsqrt(var + BN_EPS), 0.0)
        if i == 4:
            z = hf
        h = hf.astype(jnp.bfloat16)
    w, b = layers[N_BLOCKS]
    y = jnp.dot(h, w.astype(jnp.bfloat16), preferred_element_type=jnp.float32) + b
    return y, z


# ---------------------------------- main --------------------------------------
if __name__ == "__main__":
    key = jax.random.PRNGKey(0)
    k_param, k_x = jax.random.split(key)

    layers, _covs = init_params(k_param)
    w_slab, v_slab = pack_params(layers)

    # x: (batch=2, seq=4, input_dim=16); forward flattens to (-1, input_dim)
    x = jax.random.normal(k_x, (2, 4, INPUT_DIM), jnp.float32)

    y, z = autoencoder_forward(x, w_slab, v_slab)
    y = jax.block_until_ready(y)
    z = jax.block_until_ready(z)

    y_ref, z_ref = ref_forward(x, layers)
    assert y.shape == (8, INPUT_DIM)
    assert z.shape == (8, LATENT_DIM)
    assert jnp.allclose(y, y_ref, atol=1e-2, rtol=1e-2), float(jnp.max(jnp.abs(y - y_ref)))
    assert jnp.allclose(z, z_ref, atol=1e-2, rtol=1e-2), float(jnp.max(jnp.abs(z - z_ref)))

    print("KERNEL_OK")
</pallas_src>

<mosaic_0001>
module attributes {stable_mosaic.version = 11 : i64} {
  func.func @ae_kernel(%arg0: memref<8x128xbf16, #tpu.memory_space<vmem>>, %arg1: memref<1280x128xbf16, #tpu.memory_space<vmem>>, %arg2: memref<28x128xf32, #tpu.memory_space<vmem>>, %arg3: memref<8x256xf32, #tpu.memory_space<vmem>>) attributes {dimension_semantics = [], scalar_prefetch = 0 : i64, scratch_operands = 0 : i64, tpu.core_type = #tpu.core_type<tc>} {
    %c0 = arith.constant 0 : index
    %c0_0 = arith.constant 0 : index
    %0 = vector.load %arg0[%c0, %c0_0] : memref<8x128xbf16, #tpu.memory_space<vmem>>, vector<8x128xbf16>
    %c0_1 = arith.constant 0 : index
    %c0_2 = arith.constant 0 : index
    %1 = vector.load %arg1[%c0_1, %c0_2] : memref<1280x128xbf16, #tpu.memory_space<vmem>>, vector<128x128xbf16>
    %cst = arith.constant dense<0.000000e+00> : vector<8x128xf32>
    %2 = tpu.matmul %0, %1, %cst {dimension_numbers = #tpu.dot_dimension_numbers<[1], [0], [0], [1], [0, 0, 1, 1], [], []>} : vector<8x128xbf16>, vector<128x128xbf16>, vector<8x128xf32> -> vector<8x128xf32>
    %c0_3 = arith.constant 0 : index
    %c0_4 = arith.constant 0 : index
    %3 = vector.load %arg2[%c0_3, %c0_4] : memref<28x128xf32, #tpu.memory_space<vmem>>, vector<1x128xf32>
    %c1 = arith.constant 1 : index
    %c0_5 = arith.constant 0 : index
    %4 = vector.load %arg2[%c1, %c0_5] : memref<28x128xf32, #tpu.memory_space<vmem>>, vector<1x128xf32>
    %c2 = arith.constant 2 : index
    %c0_6 = arith.constant 0 : index
    %5 = vector.load %arg2[%c2, %c0_6] : memref<28x128xf32, #tpu.memory_space<vmem>>, vector<1x128xf32>
    %6 = vector.broadcast %3 : vector<1x128xf32> to vector<8x128xf32>
    %7 = arith.addf %2, %6 : vector<8x128xf32>
    %cst_7 = arith.constant dense<0.000000e+00> : vector<128xf32>
    %8 = vector.multi_reduction <add>, %7, %cst_7 [0] : vector<8x128xf32> to vector<128xf32>
    %9 = vector.shape_cast %8 : vector<128xf32> to vector<1x128xf32>
    %cst_8 = arith.constant 8.000000e+00 : f32
    %10 = vector.broadcast %cst_8 : f32 to vector<1x128xf32>
    %11 = arith.divf %9, %10 : vector<1x128xf32>
    %12 = vector.broadcast %11 : vector<1x128xf32> to vector<8x128xf32>
    %13 = arith.subf %7, %12 : vector<8x128xf32>
    %14 = arith.mulf %13, %13 : vector<8x128xf32>
    %cst_9 = arith.constant dense<0.000000e+00> : vector<128xf32>
    %15 = vector.multi_reduction <add>, %14, %cst_9 [0] : vector<8x128xf32> to vector<128xf32>
    %16 = vector.shape_cast %15 : vector<128xf32> to vector<1x128xf32>
    %cst_10 = arith.constant 8.000000e+00 : f32
    %17 = vector.broadcast %cst_10 : f32 to vector<1x128xf32>
    %18 = arith.divf %16, %17 : vector<1x128xf32>
    %cst_11 = arith.constant 1.000000e-03 : f32
    %19 = vector.broadcast %cst_11 : f32 to vector<1x128xf32>
    %20 = arith.addf %18, %19 : vector<1x128xf32>
    %21 = math.rsqrt %20 : vector<1x128xf32>
    %22 = arith.mulf %4, %21 : vector<1x128xf32>
    %23 = arith.mulf %11, %22 : vector<1x128xf32>
    %24 = arith.subf %5, %23 : vector<1x128xf32>
    %25 = vector.broadcast %22 : vector<1x128xf32> to vector<8x128xf32>
    %26 = arith.mulf %7, %25 : vector<8x128xf32>
    %27 = vector.broadcast %24 : vector<1x128xf32> to vector<8x128xf32>
    %28 = arith.addf %26, %27 : vector<8x128xf32>
    %cst_12 = arith.constant 0.000000e+00 : f32
    %29 = vector.broadcast %cst_12 : f32 to vector<8x128xf32>
    %30 = arith.maximumf %28, %29 : vector<8x128xf32>
    %31 = arith.truncf %30 : vector<8x128xf32> to vector<8x128xbf16>
    %c128 = arith.constant 128 : index
    %c0_13 = arith.constant 0 : index
    %32 = vector.load %arg1[%c128, %c0_13] : memref<1280x128xbf16, #tpu.memory_space<vmem>>, vector<128x128xbf16>
    %cst_14 = arith.constant dense<0.000000e+00> : vector<8x128xf32>
    %33 = tpu.matmul %31, %32, %cst_14 {dimension_numbers = #tpu.dot_dimension_numbers<[1], [0], [0], [1], [0, 0, 1, 1], [], []>} : vector<8x128xbf16>, vector<128x128xbf16>, vector<8x128xf32> -> vector<8x128xf32>
    %c3 = arith.constant 3 : index
    %c0_15 = arith.constant 0 : index
    %34 = vector.load %arg2[%c3, %c0_15] : memref<28x128xf32, #tpu.memory_space<vmem>>, vector<1x128xf32>
    %c4 = arith.constant 4 : index
    %c0_16 = arith.constant 0 : index
    %35 = vector.load %arg2[%c4, %c0_16] : memref<28x128xf32, #tpu.memory_space<vmem>>, vector<1x128xf32>
    %c5 = arith.constant 5 : index
    %c0_17 = arith.constant 0 : index
    %36 = vector.load %arg2[%c5, %c0_17] : memref<28x128xf32, #tpu.memory_space<vmem>>, vector<1x128xf32>
    %37 = vector.broadcast %34 : vector<1x128xf32> to vector<8x128xf32>
    %38 = arith.addf %33, %37 : vector<8x128xf32>
    %cst_18 = arith.constant dense<0.000000e+00> : vector<128xf32>
    %39 = vector.multi_reduction <add>, %38, %cst_18 [0] : vector<8x128xf32> to vector<128xf32>
    %40 = vector.shape_cast %39 : vector<128xf32> to vector<1x128xf32>
    %cst_19 = arith.constant 8.000000e+00 : f32
    %41 = vector.broadcast %cst_19 : f32 to vector<1x128xf32>
    %42 = arith.divf %40, %41 : vector<1x128xf32>
    %43 = vector.broadcast %42 : vector<1x128xf32> to vector<8x128xf32>
    %44 = arith.subf %38, %43 : vector<8x128xf32>
    %45 = arith.mulf %44, %44 : vector<8x128xf32>
    %cst_20 = arith.constant dense<0.000000e+00> : vector<128xf32>
    %46 = vector.multi_reduction <add>, %45, %cst_20 [0] : vector<8x128xf32> to vector<128xf32>
    %47 = vector.shape_cast %46 : vector<128xf32> to vector<1x128xf32>
    %cst_21 = arith.constant 8.000000e+00 : f32
    %48 = vector.broadcast %cst_21 : f32 to vector<1x128xf32>
    %49 = arith.divf %47, %48 : vector<1x128xf32>
    %cst_22 = arith.constant 1.000000e-03 : f32
    %50 = vector.broadcast %cst_22 : f32 to vector<1x128xf32>
    %51 = arith.addf %49, %50 : vector<1x128xf32>
    %52 = math.rsqrt %51 : vector<1x128xf32>
    %53 = arith.mulf %35, %52 : vector<1x128xf32>
    %54 = arith.mulf %42, %53 : vector<1x128xf32>
    %55 = arith.subf %36, %54 : vector<1x128xf32>
    %56 = vector.broadcast %53 : vector<1x128xf32> to vector<8x128xf32>
    %57 = arith.mulf %38, %56 : vector<8x128xf32>
    %58 = vector.broadcast %55 : vector<1x128xf32> to vector<8x128xf32>
    %59 = arith.addf %57, %58 : vector<8x128xf32>
    %cst_23 = arith.constant 0.000000e+00 : f32
    %60 = vector.broadcast %cst_23 : f32 to vector<8x128xf32>
    %61 = arith.maximumf %59, %60 : vector<8x128xf32>
    %62 = arith.truncf %61 : vector<8x128xf32> to vector<8x128xbf16>
    %c256 = arith.constant 256 : index
    %c0_24 = arith.constant 0 : index
    %63 = vector.load %arg1[%c256, %c0_24] : memref<1280x128xbf16, #tpu.memory_space<vmem>>, vector<128x128xbf16>
    %cst_25 = arith.constant dense<0.000000e+00> : vector<8x128xf32>
    %64 = tpu.matmul %62, %63, %cst_25 {dimension_numbers = #tpu.dot_dimension_numbers<[1], [0], [0], [1], [0, 0, 1, 1], [], []>} : vector<8x128xbf16>, vector<128x128xbf16>, vector<8x128xf32> -> vector<8x128xf32>
    %c6 = arith.constant 6 : index
    %c0_26 = arith.constant 0 : index
    %65 = vector.load %arg2[%c6, %c0_26] : memref<28x128xf32, #tpu.memory_space<vmem>>, vector<1x128xf32>
    %c7 = arith.constant 7 : index
    %c0_27 = arith.constant 0 : index
    %66 = vector.load %arg2[%c7, %c0_27] : memref<28x128xf32, #tpu.memory_space<vmem>>, vector<1x128xf32>
    %c8 = arith.constant 8 : index
    %c0_28 = arith.constant 0 : index
    %67 = vector.load %arg2[%c8, %c0_28] : memref<28x128xf32, #tpu.memory_space<vmem>>, vector<1x128xf32>
    %68 = vector.broadcast %65 : vector<1x128xf32> to vector<8x128xf32>
    %69 = arith.addf %64, %68 : vector<8x128xf32>
    %cst_29 = arith.constant dense<0.000000e+00> : vector<128xf32>
    %70 = vector.multi_reduction <add>, %69, %cst_29 [0] : vector<8x128xf32> to vector<128xf32>
    %71 = vector.shape_cast %70 : vector<128xf32> to vector<1x128xf32>
    %cst_30 = arith.constant 8.000000e+00 : f32
    %72 = vector.broadcast %cst_30 : f32 to vector<1x128xf32>
    %73 = arith.divf %71, %72 : vector<1x128xf32>
    %74 = vector.broadcast %73 : vector<1x128xf32> to vector<8x128xf32>
    %75 = arith.subf %69, %74 : vector<8x128xf32>
    %76 = arith.mulf %75, %75 : vector<8x128xf32>
    %cst_31 = arith.constant dense<0.000000e+00> : vector<128xf32>
    %77 = vector.multi_reduction <add>, %76, %cst_31 [0] : vector<8x128xf32> to vector<128xf32>
    %78 = vector.shape_cast %77 : vector<128xf32> to vector<1x128xf32>
    %cst_32 = arith.constant 8.000000e+00 : f32
    %79 = vector.broadcast %cst_32 : f32 to vector<1x128xf32>
    %80 = arith.divf %78, %79 : vector<1x128xf32>
    %cst_33 = arith.constant 1.000000e-03 : f32
    %81 = vector.broadcast %cst_33 : f32 to vector<1x128xf32>
    %82 = arith.addf %80, %81 : vector<1x128xf32>
    %83 = math.rsqrt %82 : vector<1x128xf32>
    %84 = arith.mulf %66, %83 : vector<1x128xf32>
    %85 = arith.mulf %73, %84 : vector<1x128xf32>
    %86 = arith.subf %67, %85 : vector<1x128xf32>
    %87 = vector.broadcast %84 : vector<1x128xf32> to vector<8x128xf32>
    %88 = arith.mulf %69, %87 : vector<8x128xf32>
    %89 = vector.broadcast %86 : vector<1x128xf32> to vector<8x128xf32>
    %90 = arith.addf %88, %89 : vector<8x128xf32>
    %cst_34 = arith.constant 0.000000e+00 : f32
    %91 = vector.broadcast %cst_34 : f32 to vector<8x128xf32>
    %92 = arith.maximumf %90, %91 : vector<8x128xf32>
    %93 = arith.truncf %92 : vector<8x128xf32> to vector<8x128xbf16>
    %c384 = arith.constant 384 : index
    %c0_35 = arith.constant 0 : index
    %94 = vector.load %arg1[%c384, %c0_35] : memref<1280x128xbf16, #tpu.memory_space<vmem>>, vector<128x128xbf16>
    %cst_36 = arith.constant dense<0.000000e+00> : vector<8x128xf32>
    %95 = tpu.matmul %93, %94, %cst_36 {dimension_numbers = #tpu.dot_dimension_numbers<[1], [0], [0], [1], [0, 0, 1, 1], [], []>} : vector<8x128xbf16>, vector<128x128xbf16>, vector<8x128xf32> -> vector<8x128xf32>
    %c9 = arith.constant 9 : index
    %c0_37 = arith.constant 0 : index
    %96 = vector.load %arg2[%c9, %c0_37] : memref<28x128xf32, #tpu.memory_space<vmem>>, vector<1x128xf32>
    %c10 = arith.constant 10 : index
    %c0_38 = arith.constant 0 : index
    %97 = vector.load %arg2[%c10, %c0_38] : memref<28x128xf32, #tpu.memory_space<vmem>>, vector<1x128xf32>
    %c11 = arith.constant 11 : index
    %c0_39 = arith.constant 0 : index
    %98 = vector.load %arg2[%c11, %c0_39] : memref<28x128xf32, #tpu.memory_space<vmem>>, vector<1x128xf32>
    %99 = vector.broadcast %96 : vector<1x128xf32> to vector<8x128xf32>
    %100 = arith.addf %95, %99 : vector<8x128xf32>
    %cst_40 = arith.constant dense<0.000000e+00> : vector<128xf32>
    %101 = vector.multi_reduction <add>, %100, %cst_40 [0] : vector<8x128xf32> to vector<128xf32>
    %102 = vector.shape_cast %101 : vector<128xf32> to vector<1x128xf32>
    %cst_41 = arith.constant 8.000000e+00 : f32
    %103 = vector.broadcast %cst_41 : f32 to vector<1x128xf32>
    %104 = arith.divf %102, %103 : vector<1x128xf32>
    %105 = vector.broadcast %104 : vector<1x128xf32> to vector<8x128xf32>
    %106 = arith.subf %100, %105 : vector<8x128xf32>
    %107 = arith.mulf %106, %106 : vector<8x128xf32>
    %cst_42 = arith.constant dense<0.000000e+00> : vector<128xf32>
    %108 = vector.multi_reduction <add>, %107, %cst_42 [0] : vector<8x128xf32> to vector<128xf32>
    %109 = vector.shape_cast %108 : vector<128xf32> to vector<1x128xf32>
    %cst_43 = arith.constant 8.000000e+00 : f32
    %110 = vector.broadcast %cst_43 : f32 to vector<1x128xf32>
    %111 = arith.divf %109, %110 : vector<1x128xf32>
    %cst_44 = arith.constant 1.000000e-03 : f32
    %112 = vector.broadcast %cst_44 : f32 to vector<1x128xf32>
    %113 = arith.addf %111, %112 : vector<1x128xf32>
    %114 = math.rsqrt %113 : vector<1x128xf32>
    %115 = arith.mulf %97, %114 : vector<1x128xf32>
    %116 = arith.mulf %104, %115 : vector<1x128xf32>
    %117 = arith.subf %98, %116 : vector<1x128xf32>
    %118 = vector.broadcast %115 : vector<1x128xf32> to vector<8x128xf32>
    %119 = arith.mulf %100, %118 : vector<8x128xf32>
    %120 = vector.broadcast %117 : vector<1x128xf32> to vector<8x128xf32>
    %121 = arith.addf %119, %120 : vector<8x128xf32>
    %cst_45 = arith.constant 0.000000e+00 : f32
    %122 = vector.broadcast %cst_45 : f32 to vector<8x128xf32>
    %123 = arith.maximumf %121, %122 : vector<8x128xf32>
    %124 = arith.truncf %123 : vector<8x128xf32> to vector<8x128xbf16>
    %c512 = arith.constant 512 : index
    %c0_46 = arith.constant 0 : index
    %125 = vector.load %arg1[%c512, %c0_46] : memref<1280x128xbf16, #tpu.memory_space<vmem>>, vector<128x128xbf16>
    %cst_47 = arith.constant dense<0.000000e+00> : vector<8x128xf32>
    %126 = tpu.matmul %124, %125, %cst_47 {dimension_numbers = #tpu.dot_dimension_numbers<[1], [0], [0], [1], [0, 0, 1, 1], [], []>} : vector<8x128xbf16>, vector<128x128xbf16>, vector<8x128xf32> -> vector<8x128xf32>
    %c12 = arith.constant 12 : index
    %c0_48 = arith.constant 0 : index
    %127 = vector.load %arg2[%c12, %c0_48] : memref<28x128xf32, #tpu.memory_space<vmem>>, vector<1x128xf32>
    %c13 = arith.constant 13 : index
    %c0_49 = arith.constant 0 : index
    %128 = vector.load %arg2[%c13, %c0_49] : memref<28x128xf32, #tpu.memory_space<vmem>>, vector<1x128xf32>
    %c14 = arith.constant 14 : index
    %c0_50 = arith.constant 0 : index
    %129 = vector.load %arg2[%c14, %c0_50] : memref<28x128xf32, #tpu.memory_space<vmem>>, vector<1x128xf32>
    %130 = vector.broadcast %127 : vector<1x128xf32> to vector<8x128xf32>
    %131 = arith.addf %126, %130 : vector<8x128xf32>
    %cst_51 = arith.constant dense<0.000000e+00> : vector<128xf32>
    %132 = vector.multi_reduction <add>, %131, %cst_51 [0] : vector<8x128xf32> to vector<128xf32>
    %133 = vector.shape_cast %132 : vector<128xf32> to vector<1x128xf32>
    %cst_52 = arith.constant 8.000000e+00 : f32
    %134 = vector.broadcast %cst_52 : f32 to vector<1x128xf32>
    %135 = arith.divf %133, %134 : vector<1x128xf32>
    %136 = vector.broadcast %135 : vector<1x128xf32> to vector<8x128xf32>
    %137 = arith.subf %131, %136 : vector<8x128xf32>
    %138 = arith.mulf %137, %137 : vector<8x128xf32>
    %cst_53 = arith.constant dense<0.000000e+00> : vector<128xf32>
    %139 = vector.multi_reduction <add>, %138, %cst_53 [0] : vector<8x128xf32> to vector<128xf32>
    %140 = vector.shape_cast %139 : vector<128xf32> to vector<1x128xf32>
    %cst_54 = arith.constant 8.000000e+00 : f32
    %141 = vector.broadcast %cst_54 : f32 to vector<1x128xf32>
    %142 = arith.divf %140, %141 : vector<1x128xf32>
    %cst_55 = arith.constant 1.000000e-03 : f32
    %143 = vector.broadcast %cst_55 : f32 to vector<1x128xf32>
    %144 = arith.addf %142, %143 : vector<1x128xf32>
    %145 = math.rsqrt %144 : vector<1x128xf32>
    %146 = arith.mulf %128, %145 : vector<1x128xf32>
    %147 = arith.mulf %135, %146 : vector<1x128xf32>
    %148 = arith.subf %129, %147 : vector<1x128xf32>
    %149 = vector.broadcast %146 : vector<1x128xf32> to vector<8x128xf32>
    %150 = arith.mulf %131, %149 : vector<8x128xf32>
    %151 = vector.broadcast %148 : vector<1x128xf32> to vector<8x128xf32>
    %152 = arith.addf %150, %151 : vector<8x128xf32>
    %cst_56 = arith.constant 0.000000e+00 : f32
    %153 = vector.broadcast %cst_56 : f32 to vector<8x128xf32>
    %154 = arith.maximumf %152, %153 : vector<8x128xf32>
    %c0_57 = arith.constant 0 : index
    %c128_58 = arith.constant 128 : index
    %155 = vector.load %arg3[%c0_57, %c128_58] : memref<8x256xf32, #tpu.memory_space<vmem>>, vector<8x128xf32>
    tpu.vector_store %arg3[%c0_57, %c128_58], %154 {strides = array<i32>} : memref<8x256xf32, #tpu.memory_space<vmem>>, vector<8x128xf32>,
    %156 = arith.truncf %154 : vector<8x128xf32> to vector<8x128xbf16>
    %c640 = arith.constant 640 : index
    %c0_59 = arith.constant 0 : index
    %157 = vector.load %arg1[%c640, %c0_59] : memref<1280x128xbf16, #tpu.memory_space<vmem>>, vector<128x128xbf16>
    %cst_60 = arith.constant dense<0.000000e+00> : vector<8x128xf32>
    %158 = tpu.matmul %156, %157, %cst_60 {dimension_numbers = #tpu.dot_dimension_numbers<[1], [0], [0], [1], [0, 0, 1, 1], [], []>} : vector<8x128xbf16>, vector<128x128xbf16>, vector<8x128xf32> -> vector<8x128xf32>
    %c15 = arith.constant 15 : index
    %c0_61 = arith.constant 0 : index
    %159 = vector.load %arg2[%c15, %c0_61] : memref<28x128xf32, #tpu.memory_space<vmem>>, vector<1x128xf32>
    %c16 = arith.constant 16 : index
    %c0_62 = arith.constant 0 : index
    %160 = vector.load %arg2[%c16, %c0_62] : memref<28x128xf32, #tpu.memory_space<vmem>>, vector<1x128xf32>
    %c17 = arith.constant 17 : index
    %c0_63 = arith.constant 0 : index
    %161 = vector.load %arg2[%c17, %c0_63] : memref<28x128xf32, #tpu.memory_space<vmem>>, vector<1x128xf32>
    %162 = vector.broadcast %159 : vector<1x128xf32> to vector<8x128xf32>
    %163 = arith.addf %158, %162 : vector<8x128xf32>
    %cst_64 = arith.constant dense<0.000000e+00> : vector<128xf32>
    %164 = vector.multi_reduction <add>, %163, %cst_64 [0] : vector<8x128xf32> to vector<128xf32>
    %165 = vector.shape_cast %164 : vector<128xf32> to vector<1x128xf32>
    %cst_65 = arith.constant 8.000000e+00 : f32
    %166 = vector.broadcast %cst_65 : f32 to vector<1x128xf32>
    %167 = arith.divf %165, %166 : vector<1x128xf32>
    %168 = vector.broadcast %167 : vector<1x128xf32> to vector<8x128xf32>
    %169 = arith.subf %163, %168 : vector<8x128xf32>
    %170 = arith.mulf %169, %169 : vector<8x128xf32>
    %cst_66 = arith.constant dense<0.000000e+00> : vector<128xf32>
    %171 = vector.multi_reduction <add>, %170, %cst_66 [0] : vector<8x128xf32> to vector<128xf32>
    %172 = vector.shape_cast %171 : vector<128xf32> to vector<1x128xf32>
    %cst_67 = arith.constant 8.000000e+00 : f32
    %173 = vector.broadcast %cst_67 : f32 to vector<1x128xf32>
    %174 = arith.divf %172, %173 : vector<1x128xf32>
    %cst_68 = arith.constant 1.000000e-03 : f32
    %175 = vector.broadcast %cst_68 : f32 to vector<1x128xf32>
    %176 = arith.addf %174, %175 : vector<1x128xf32>
    %177 = math.rsqrt %176 : vector<1x128xf32>
    %178 = arith.mulf %160, %177 : vector<1x128xf32>
    %179 = arith.mulf %167, %178 : vector<1x128xf32>
    %180 = arith.subf %161, %179 : vector<1x128xf32>
    %181 = vector.broadcast %178 : vector<1x128xf32> to vector<8x128xf32>
    %182 = arith.mulf %163, %181 : vector<8x128xf32>
    %183 = vector.broadcast %180 : vector<1x128xf32> to vector<8x128xf32>
    %184 = arith.addf %182, %183 : vector<8x128xf32>
    %cst_69 = arith.constant 0.000000e+00 : f32
    %185 = vector.broadcast %cst_69 : f32 to vector<8x128xf32>
    %186 = arith.maximumf %184, %185 : vector<8x128xf32>
    %187 = arith.truncf %186 : vector<8x128xf32> to vector<8x128xbf16>
    %c768 = arith.constant 768 : index
    %c0_70 = arith.constant 0 : index
    %188 = vector.load %arg1[%c768, %c0_70] : memref<1280x128xbf16, #tpu.memory_space<vmem>>, vector<128x128xbf16>
    %cst_71 = arith.constant dense<0.000000e+00> : vector<8x128xf32>
    %189 = tpu.matmul %187, %188, %cst_71 {dimension_numbers = #tpu.dot_dimension_numbers<[1], [0], [0], [1], [0, 0, 1, 1], [], []>} : vector<8x128xbf16>, vector<128x128xbf16>, vector<8x128xf32> -> vector<8x128xf32>
    %c18 = arith.constant 18 : index
    %c0_72 = arith.constant 0 : index
    %190 = vector.load %arg2[%c18, %c0_72] : memref<28x128xf32, #tpu.memory_space<vmem>>, vector<1x128xf32>
    %c19 = arith.constant 19 : index
    %c0_73 = arith.constant 0 : index
    %191 = vector.load %arg2[%c19, %c0_73] : memref<28x128xf32, #tpu.memory_space<vmem>>, vector<1x128xf32>
    %c20 = arith.constant 20 : index
    %c0_74 = arith.constant 0 : index
    %192 = vector.load %arg2[%c20, %c0_74] : memref<28x128xf32, #tpu.memory_space<vmem>>, vector<1x128xf32>
    %193 = vector.broadcast %190 : vector<1x128xf32> to vector<8x128xf32>
    %194 = arith.addf %189, %193 : vector<8x128xf32>
    %cst_75 = arith.constant dense<0.000000e+00> : vector<128xf32>
    %195 = vector.multi_reduction <add>, %194, %cst_75 [0] : vector<8x128xf32> to vector<128xf32>
    %196 = vector.shape_cast %195 : vector<128xf32> to vector<1x128xf32>
    %cst_76 = arith.constant 8.000000e+00 : f32
    %197 = vector.broadcast %cst_76 : f32 to vector<1x128xf32>
    %198 = arith.divf %196, %197 : vector<1x128xf32>
    %199 = vector.broadcast %198 : vector<1x128xf32> to vector<8x128xf32>
    %200 = arith.subf %194, %199 : vector<8x128xf32>
    %201 = arith.mulf %200, %200 : vector<8x128xf32>
    %cst_77 = arith.constant dense<0.000000e+00> : vector<128xf32>
    %202 = vector.multi_reduction <add>, %201, %cst_77 [0] : vector<8x128xf32> to vector<128xf32>
    %203 = vector.shape_cast %202 : vector<128xf32> to vector<1x128xf32>
    %cst_78 = arith.constant 8.000000e+00 : f32
    %204 = vector.broadcast %cst_78 : f32 to vector<1x128xf32>
    %205 = arith.divf %203, %204 : vector<1x128xf32>
    %cst_79 = arith.constant 1.000000e-03 : f32
    %206 = vector.broadcast %cst_79 : f32 to vector<1x128xf32>
    %207 = arith.addf %205, %206 : vector<1x128xf32>
    %208 = math.rsqrt %207 : vector<1x128xf32>
    %209 = arith.mulf %191, %208 : vector<1x128xf32>
    %210 = arith.mulf %198, %209 : vector<1x128xf32>
    %211 = arith.subf %192, %210 : vector<1x128xf32>
    %212 = vector.broadcast %209 : vector<1x128xf32> to vector<8x128xf32>
    %213 = arith.mulf %194, %212 : vector<8x128xf32>
    %214 = vector.broadcast %211 : vector<1x128xf32> to vector<8x128xf32>
    %215 = arith.addf %213, %214 : vector<8x128xf32>
    %cst_80 = arith.constant 0.000000e+00 : f32
    %216 = vector.broadcast %cst_80 : f32 to vector<8x128xf32>
    %217 = arith.maximumf %215, %216 : vector<8x128xf32>
    %218 = arith.truncf %217 : vector<8x128xf32> to vector<8x128xbf16>
    %c896 = arith.constant 896 : index
    %c0_81 = arith.constant 0 : index
    %219 = vector.load %arg1[%c896, %c0_81] : memref<1280x128xbf16, #tpu.memory_space<vmem>>, vector<128x128xbf16>
    %cst_82 = arith.constant dense<0.000000e+00> : vector<8x128xf32>
    %220 = tpu.matmul %218, %219, %cst_82 {dimension_numbers = #tpu.dot_dimension_numbers<[1], [0], [0], [1], [0, 0, 1, 1], [], []>} : vector<8x128xbf16>, vector<128x128xbf16>, vector<8x128xf32> -> vector<8x128xf32>
    %c21 = arith.constant 21 : index
    %c0_83 = arith.constant 0 : index
    %221 = vector.load %arg2[%c21, %c0_83] : memref<28x128xf32, #tpu.memory_space<vmem>>, vector<1x128xf32>
    %c22 = arith.constant 22 : index
    %c0_84 = arith.constant 0 : index
    %222 = vector.load %arg2[%c22, %c0_84] : memref<28x128xf32, #tpu.memory_space<vmem>>, vector<1x128xf32>
    %c23 = arith.constant 23 : index
    %c0_85 = arith.constant 0 : index
    %223 = vector.load %arg2[%c23, %c0_85] : memref<28x128xf32, #tpu.memory_space<vmem>>, vector<1x128xf32>
    %224 = vector.broadcast %221 : vector<1x128xf32> to vector<8x128xf32>
    %225 = arith.addf %220, %224 : vector<8x128xf32>
    %cst_86 = arith.constant dense<0.000000e+00> : vector<128xf32>
    %226 = vector.multi_reduction <add>, %225, %cst_86 [0] : vector<8x128xf32> to vector<128xf32>
    %227 = vector.shape_cast %226 : vector<128xf32> to vector<1x128xf32>
    %cst_87 = arith.constant 8.000000e+00 : f32
    %228 = vector.broadcast %cst_87 : f32 to vector<1x128xf32>
    %229 = arith.divf %227, %228 : vector<1x128xf32>
    %230 = vector.broadcast %229 : vector<1x128xf32> to vector<8x128xf32>
    %231 = arith.subf %225, %230 : vector<8x128xf32>
    %232 = arith.mulf %231, %231 : vector<8x128xf32>
    %cst_88 = arith.constant dense<0.000000e+00> : vector<128xf32>
    %233 = vector.multi_reduction <add>, %232, %cst_88 [0] : vector<8x128xf32> to vector<128xf32>
    %234 = vector.shape_cast %233 : vector<128xf32> to vector<1x128xf32>
    %cst_89 = arith.constant 8.000000e+00 : f32
    %235 = vector.broadcast %cst_89 : f32 to vector<1x128xf32>
    %236 = arith.divf %234, %235 : vector<1x128xf32>
    %cst_90 = arith.constant 1.000000e-03 : f32
    %237 = vector.broadcast %cst_90 : f32 to vector<1x128xf32>
    %238 = arith.addf %236, %237 : vector<1x128xf32>
    %239 = math.rsqrt %238 : vector<1x128xf32>
    %240 = arith.mulf %222, %239 : vector<1x128xf32>
    %241 = arith.mulf %229, %240 : vector<1x128xf32>
    %242 = arith.subf %223, %241 : vector<1x128xf32>
    %243 = vector.broadcast %240 : vector<1x128xf32> to vector<8x128xf32>
    %244 = arith.mulf %225, %243 : vector<8x128xf32>
    %245 = vector.broadcast %242 : vector<1x128xf32> to vector<8x128xf32>
    %246 = arith.addf %244, %245 : vector<8x128xf32>
    %cst_91 = arith.constant 0.000000e+00 : f32
    %247 = vector.broadcast %cst_91 : f32 to vector<8x128xf32>
    %248 = arith.maximumf %246, %247 : vector<8x128xf32>
    %249 = arith.truncf %248 : vector<8x128xf32> to vector<8x128xbf16>
    %c1024 = arith.constant 1024 : index
    %c0_92 = arith.constant 0 : index
    %250 = vector.load %arg1[%c1024, %c0_92] : memref<1280x128xbf16, #tpu.memory_space<vmem>>, vector<128x128xbf16>
    %cst_93 = arith.constant dense<0.000000e+00> : vector<8x128xf32>
    %251 = tpu.matmul %249, %250, %cst_93 {dimension_numbers = #tpu.dot_dimension_numbers<[1], [0], [0], [1], [0, 0, 1, 1], [], []>} : vector<8x128xbf16>, vector<128x128xbf16>, vector<8x128xf32> -> vector<8x128xf32>
    %c24 = arith.constant 24 : index
    %c0_94 = arith.constant 0 : index
    %252 = vector.load %arg2[%c24, %c0_94] : memref<28x128xf32, #tpu.memory_space<vmem>>, vector<1x128xf32>
    %c25 = arith.constant 25 : index
    %c0_95 = arith.constant 0 : index
    %253 = vector.load %arg2[%c25, %c0_95] : memref<28x128xf32, #tpu.memory_space<vmem>>, vector<1x128xf32>
    %c26 = arith.constant 26 : index
    %c0_96 = arith.constant 0 : index
    %254 = vector.load %arg2[%c26, %c0_96] : memref<28x128xf32, #tpu.memory_space<vmem>>, vector<1x128xf32>
    %255 = vector.broadcast %252 : vector<1x128xf32> to vector<8x128xf32>
    %256 = arith.addf %251, %255 : vector<8x128xf32>
    %cst_97 = arith.constant dense<0.000000e+00> : vector<128xf32>
    %257 = vector.multi_reduction <add>, %256, %cst_97 [0] : vector<8x128xf32> to vector<128xf32>
    %258 = vector.shape_cast %257 : vector<128xf32> to vector<1x128xf32>
    %cst_98 = arith.constant 8.000000e+00 : f32
    %259 = vector.broadcast %cst_98 : f32 to vector<1x128xf32>
    %260 = arith.divf %258, %259 : vector<1x128xf32>
    %261 = vector.broadcast %260 : vector<1x128xf32> to vector<8x128xf32>
    %262 = arith.subf %256, %261 : vector<8x128xf32>
    %263 = arith.mulf %262, %262 : vector<8x128xf32>
    %cst_99 = arith.constant dense<0.000000e+00> : vector<128xf32>
    %264 = vector.multi_reduction <add>, %263, %cst_99 [0] : vector<8x128xf32> to vector<128xf32>
    %265 = vector.shape_cast %264 : vector<128xf32> to vector<1x128xf32>
    %cst_100 = arith.constant 8.000000e+00 : f32
    %266 = vector.broadcast %cst_100 : f32 to vector<1x128xf32>
    %267 = arith.divf %265, %266 : vector<1x128xf32>
    %cst_101 = arith.constant 1.000000e-03 : f32
    %268 = vector.broadcast %cst_101 : f32 to vector<1x128xf32>
    %269 = arith.addf %267, %268 : vector<1x128xf32>
    %270 = math.rsqrt %269 : vector<1x128xf32>
    %271 = arith.mulf %253, %270 : vector<1x128xf32>
    %272 = arith.mulf %260, %271 : vector<1x128xf32>
    %273 = arith.subf %254, %272 : vector<1x128xf32>
    %274 = vector.broadcast %271 : vector<1x128xf32> to vector<8x128xf32>
    %275 = arith.mulf %256, %274 : vector<8x128xf32>
    %276 = vector.broadcast %273 : vector<1x128xf32> to vector<8x128xf32>
    %277 = arith.addf %275, %276 : vector<8x128xf32>
    %cst_102 = arith.constant 0.000000e+00 : f32
    %278 = vector.broadcast %cst_102 : f32 to vector<8x128xf32>
    %279 = arith.maximumf %277, %278 : vector<8x128xf32>
    %280 = arith.truncf %279 : vector<8x128xf32> to vector<8x128xbf16>
    %c27 = arith.constant 27 : index
    %c0_103 = arith.constant 0 : index
    %281 = vector.load %arg2[%c27, %c0_103] : memref<28x128xf32, #tpu.memory_space<vmem>>, vector<1x128xf32>
    %c1152 = arith.constant 1152 : index
    %c0_104 = arith.constant 0 : index
    %282 = vector.load %arg1[%c1152, %c0_104] : memref<1280x128xbf16, #tpu.memory_space<vmem>>, vector<128x128xbf16>
    %cst_105 = arith.constant dense<0.000000e+00> : vector<8x128xf32>
    %283 = tpu.matmul %280, %282, %cst_105 {dimension_numbers = #tpu.dot_dimension_numbers<[1], [0], [0], [1], [0, 0, 1, 1], [], []>} : vector<8x128xbf16>, vector<128x128xbf16>, vector<8x128xf32> -> vector<8x128xf32>
    %284 = vector.broadcast %281 : vector<1x128xf32> to vector<8x128xf32>
    %285 = arith.addf %283, %284 : vector<8x128xf32>
    %c0_106 = arith.constant 0 : index
    %c0_107 = arith.constant 0 : index
    %286 = vector.load %arg3[%c0_106, %c0_107] : memref<8x256xf32, #tpu.memory_space<vmem>>, vector<8x128xf32>
    tpu.vector_store %arg3[%c0_106, %c0_107], %285 {strides = array<i32>} : memref<8x256xf32, #tpu.memory_space<vmem>>, vector<8x128xf32>,
    return
  }
}

</mosaic_0001>

<llo_original>
// kernel: autoencoder_forward.1
$region0: #{autoencoder_forward.1}
  #allocation0 [shape = 'u32[]', space=smem, size = 0x4, offset = 0x4, fixed_abs, tag = 'smem constant byte address 0x4 - core index']
  #allocation1 [shape = 'u32[72,128]{1,0:T(1,128)}', space=vmem, size = 0x9000, scoped, tag = 'internal scratch']
  %s0 = inlined_call_operand.vmem [shape: bf16[8,128], index: 0, kind: input, shape index: {}]
  %s1 = inlined_call_operand.hbm [shape: bf16[1280,128], index: 1, kind: input, shape index: {}]
  %s2 = inlined_call_operand.hbm [shape: f32[28,128], index: 2, kind: input, shape index: {}]
  %s3 = inlined_call_operand.vmem [shape: f32[8,256], index: 3, kind: output, shape index: {}]
  %s4 = sld [smem:[#allocation0]]
  $region30: #{autoencoder_forward.1} parent=0
    _
  %s6 = ssub.s32 1, %s4
  %s7 = scalar_select 0, %s6, %s4
  $region1: #{autoencoder_forward.1} parent=0
    #allocation2 [shape = 'u8[327680]{0}', space=vmem, size = 0x50000, scoped, tag = 'input window, operand 1, single buffered']
    #allocation3 [shape = 's32[1]{0}', space=sflag, size = 0x4, scoped, tag = 'scoped memory for autoencoder_forward.1']
    #allocation4 [shape = 'u8[16384]{0}', space=vmem, size = 0x4000, scoped, tag = 'input window, operand 2, single buffered']
    #allocation5 [shape = 's32[1]{0}', space=sflag, size = 0x4, scoped, tag = 'scoped memory for autoencoder_forward.1']
    %8 = vsyncpa [#allocation3], 0
    %9 = vsyncpa [#allocation5], 0
    // Predicated region
    $region2: #{autoencoder_forward.1} parent=1 // pred_check
      _
    $region3: #{autoencoder_forward.1} parent=1 // pred_check_branch
      %11 = sbr.rel (0) target = $region5
    $region4: #{autoencoder_forward.1} parent=1 // pred_region
      _
    $region5: #{autoencoder_forward.1} parent=1 // pred_fallthru
      _
    // Predicated region
    $region6: #{autoencoder_forward.1} parent=1 // pred_check
      _
    $region7: #{autoencoder_forward.1} parent=1 // pred_check_branch
      %13 = sbr.rel (0) target = $region9
    $region8: #{autoencoder_forward.1} parent=1 // pred_region
      %15 = vsyncadd [#allocation3], 0
      %s16 = sshll.u32 %s1, 4
      %s17 = int_to_ptr.hbm [resolvable:$true] %s16
      %s18 = sshll.u32 [#allocation2], 4
      %s19 = int_to_ptr.vmem [resolvable:$true] %s18
      %24 = dma.hbm_to_vmem [thread:$0]  %s17, 10240, %s19, [#allocation3], 64, 64, 4
    $region9: #{autoencoder_forward.1} parent=1 // pred_fallthru
      _
    // Predicated region
    $region10: #{autoencoder_forward.1} parent=1 // pred_check
      _
    $region11: #{autoencoder_forward.1} parent=1 // pred_check_branch
      %26 = sbr.rel (0) target = $region13
    $region12: #{autoencoder_forward.1} parent=1 // pred_region
      %28 = vsyncadd [#allocation5], 0
      %s29 = sshll.u32 %s2, 4
      %s30 = int_to_ptr.hbm [resolvable:$true] %s29
      %s31 = sshll.u32 [#allocation4], 4
      %s32 = int_to_ptr.vmem [resolvable:$true] %s31
      %37 = dma.hbm_to_vmem [thread:$0]  %s30, 512, %s32, [#allocation5], 128, 128, 8
    $region13: #{autoencoder_forward.1} parent=1 // pred_fallthru
      _
    // Predicated region
    $region14: #{autoencoder_forward.1} parent=1 // pred_check
      _
    $region15: #{autoencoder_forward.1} parent=1 // pred_check_branch
      %39 = sbr.rel (0) target = $region17
    $region16: #{autoencoder_forward.1} parent=1 // pred_region
      %41 = dma.done [#allocation3], 10240
    $region17: #{autoencoder_forward.1} parent=1 // pred_fallthru
      _
    // Predicated region
    $region18: #{autoencoder_forward.1} parent=1 // pred_check
      _
    $region19: #{autoencoder_forward.1} parent=1 // pred_check_branch
      %43 = sbr.rel (0) target = $region21
    $region20: #{autoencoder_forward.1} parent=1 // pred_region
      %45 = dma.done [#allocation5], 512
    $region21: #{autoencoder_forward.1} parent=1 // pred_fallthru
      _
    %v46 = vld [vmem:[%s0] sm:$0xf]
    %v47 = vld [vmem:[#allocation2] sm:$0xf]
    %v48 = vld [vmem:[#allocation2 + $0x4] sm:$0xf]
    %v49 = vld [vmem:[#allocation2 + $0x8] sm:$0xf]
    %v50 = vld [vmem:[#allocation2 + $0xc] sm:$0xf]
    %v51 = vld [vmem:[#allocation2 + $0x10] sm:$0xf]
    %v52 = vld [vmem:[#allocation2 + $0x14] sm:$0xf]
    %v53 = vld [vmem:[#allocation2 + $0x18] sm:$0xf]
    %v54 = vld [vmem:[#allocation2 + $0x1c] sm:$0xf]
    %v55 = vld [vmem:[#allocation2 + $0x20] sm:$0xf]
    %v56 = vld [vmem:[#allocation2 + $0x24] sm:$0xf]
    %v57 = vld [vmem:[#allocation2 + $0x28] sm:$0xf]
    %v58 = vld [vmem:[#allocation2 + $0x2c] sm:$0xf]
    %v59 = vld [vmem:[#allocation2 + $0x30] sm:$0xf]
    %v60 = vld [vmem:[#allocation2 + $0x34] sm:$0xf]
    %v61 = vld [vmem:[#allocation2 + $0x38] sm:$0xf]
    %v62 = vld [vmem:[#allocation2 + $0x3c] sm:$0xf]
    %v63 = vld [vmem:[#allocation4] sm:$0x1]
    %v64 = vld [vmem:[#allocation4 + $0x1] sm:$0x1]
    %v65 = vld [vmem:[#allocation4 + $0x2] sm:$0x1]
    %v66 = vperm.slane %v63, 0
    %v83 = vunpack.c.l.b16 %v47
    %v84 = vunpack.c.l.b16 %v48
    %v85 = vunpack.c.l.b16 %v49
    %v86 = vunpack.c.l.b16 %v50
    %v87 = vunpack.c.l.b16 %v51
    %v88 = vunpack.c.l.b16 %v52
    %v89 = vunpack.c.l.b16 %v53
    %v90 = vunpack.c.l.b16 %v54
    %v91 = vunpack.c.l.b16 %v55
    %v92 = vunpack.c.l.b16 %v56
    %v93 = vunpack.c.l.b16 %v57
    %v94 = vunpack.c.l.b16 %v58
    %v95 = vunpack.c.l.b16 %v59
    %v96 = vunpack.c.l.b16 %v60
    %v97 = vunpack.c.l.b16 %v61
    %v98 = vunpack.c.l.b16 %v62
    %v99 = vpack.c.b16 %v84, %v83
    %v100 = vpack.c.b16 %v86, %v85
    %v101 = vpack.c.b16 %v88, %v87
    %v102 = vpack.c.b16 %v90, %v89
    %v103 = vpack.c.b16 %v92, %v91
    %v104 = vpack.c.b16 %v94, %v93
    %v105 = vpack.c.b16 %v96, %v95
    %v106 = vpack.c.b16 %v98, %v97
    %115 = vmatpush.bf16.msra.mxu0 %v106
    %116 = vmatpush.bf16.msra.mxu0 %v105
    %117 = vmatpush.bf16.msra.mxu0 %v104
    %118 = vmatpush.bf16.msra.mxu0 %v103
    %119 = vmatpush.bf16.msra.mxu0 %v102
    %120 = vmatpush.bf16.msra.mxu0 %v101
    %121 = vmatpush.bf16.msra.mxu0 %v100
    %122 = vmatpush.bf16.msra.mxu0 %v99
    %123 = vmatmul.bf16.gmra.mxu0 %v46
    %v124 = vpop.f32.mrf.mxu0
    %v125 = vadd.f32 %v66, %v124
    %v126 = vpop.f32.mrf.mxu0
    %127 = vdwg.mxu0
    %v128 = vrot.slane %v125, 4
    %v129 = vadd.f32 %v125, %v128
    %v130 = vrot.slane %v129, 2
    %v131 = vadd.f32 %v129, %v130
    %v132 = vrot.slane %v131, 1
    %v133 = vadd.f32 %v131, %v132
    %v134 = vrcp.pop 8.0
    %v135 = vmul.f32 8.0, %v134
    %v136 = vsub.f32 1.0, %v135
    %v137 = vmul.f32 %v134, %v136
    %v138 = vadd.f32 %v134, %v137
    %vm139 = vweird.f32 %v134
    %v140 = vsel %vm139, %v134, %v138
    %v141 = vmul.f32 %v133, %v140
    %v142 = vsub.f32 %v125, %v141
    %v143 = vmul.f32 %v142, %v142
    %v144 = vrot.slane %v143, 4
    %v145 = vadd.f32 %v143, %v144
    %v146 = vrot.slane %v145, 2
    %v147 = vadd.f32 %v145, %v146
    %v148 = vrot.slane %v147, 1
    %v149 = vadd.f32 %v147, %v148
    %v150 = vmul.f32 %v149, %v140
    %v151 = vadd.f32 %v150, 0.001
    %v152 = vrsqrt.pop %v151
    %v153 = vmul.f32 %v152, %v151
    %v154 = vmul.f32 %v153, %v152
    %v155 = vmul.f32 0.5, %v154
    %v156 = vsub.f32 1.5, %v155
    %v157 = vmul.f32 %v152, %v156
    %vm158 = vweird.f32 %v151
    %vm159 = vweird.f32 %v152
    %vm160 = vmor %vm158, %vm159
    %v161 = vsel %vm160, %v152, %v157
    %v162 = vmul.f32 %v64, %v161
    %v163 = vmul.f32 %v141, %v162
    %v164 = vsub.f32 %v65, %v163
    %v165 = vperm.slane %v162, 0
    %v166 = vmul.f32 %v125, %v165
    %v167 = vperm.slane %v164, 0
    %v168 = vadd.f32 %v166, %v167
    %v169 = vmax.f32 %v168, 0.0
    %v170 = vpack.c.bf16 %v169, %v169
    %v171 = vld [vmem:[#allocation2 + $0x40] sm:$0xf]
    %v172 = vld [vmem:[#allocation2 + $0x44] sm:$0xf]
    %v173 = vld [vmem:[#allocation2 + $0x48] sm:$0xf]
    %v174 = vld [vmem:[#allocation2 + $0x4c] sm:$0xf]
    %v175 = vld [vmem:[#allocation2 + $0x50] sm:$0xf]
    %v176 = vld [vmem:[#allocation2 + $0x54] sm:$0xf]
    %v177 = vld [vmem:[#allocation2 + $0x58] sm:$0xf]
    %v178 = vld [vmem:[#allocation2 + $0x5c] sm:$0xf]
    %v179 = vld [vmem:[#allocation2 + $0x60] sm:$0xf]
    %v180 = vld [vmem:[#allocation2 + $0x64] sm:$0xf]
    %v181 = vld [vmem:[#allocation2 + $0x68] sm:$0xf]
    %v182 = vld [vmem:[#allocation2 + $0x6c] sm:$0xf]
    %v183 = vld [vmem:[#allocation2 + $0x70] sm:$0xf]
    %v184 = vld [vmem:[#allocation2 + $0x74] sm:$0xf]
    %v185 = vld [vmem:[#allocation2 + $0x78] sm:$0xf]
    %v186 = vld [vmem:[#allocation2 + $0x7c] sm:$0xf]
    %v187 = vld [vmem:[#allocation4 + $0x3] sm:$0x1]
    %v188 = vld [vmem:[#allocation4 + $0x4] sm:$0x1]
    %v189 = vld [vmem:[#allocation4 + $0x5] sm:$0x1]
    %v190 = vperm.slane %v187, 0
    %v207 = vunpack.c.l.b16 %v171
    %v208 = vunpack.c.l.b16 %v172
    %v209 = vunpack.c.l.b16 %v173
    %v210 = vunpack.c.l.b16 %v174
    %v211 = vunpack.c.l.b16 %v175
    %v212 = vunpack.c.l.b16 %v176
    %v213 = vunpack.c.l.b16 %v177
    %v214 = vunpack.c.l.b16 %v178
    %v215 = vunpack.c.l.b16 %v179
    %v216 = vunpack.c.l.b16 %v180
    %v217 = vunpack.c.l.b16 %v181
    %v218 = vunpack.c.l.b16 %v182
    %v219 = vunpack.c.l.b16 %v183
    %v220 = vunpack.c.l.b16 %v184
    %v221 = vunpack.c.l.b16 %v185
    %v222 = vunpack.c.l.b16 %v186
    %v223 = vpack.c.b16 %v208, %v207
    %v224 = vpack.c.b16 %v210, %v209
    %v225 = vpack.c.b16 %v212, %v211
    %v226 = vpack.c.b16 %v214, %v213
    %v227 = vpack.c.b16 %v216, %v215
    %v228 = vpack.c.b16 %v218, %v217
    %v229 = vpack.c.b16 %v220, %v219
    %v230 = vpack.c.b16 %v222, %v221
    %239 = vmatpush.bf16.msra.mxu0 %v230
    %240 = vmatpush.bf16.msra.mxu0 %v229
    %241 = vmatpush.bf16.msra.mxu0 %v228
    %242 = vmatpush.bf16.msra.mxu0 %v227
    %243 = vmatpush.bf16.msra.mxu0 %v226
    %244 = vmatpush.bf16.msra.mxu0 %v225
    %245 = vmatpush.bf16.msra.mxu0 %v224
    %246 = vmatpush.bf16.msra.mxu0 %v223
    %247 = vmatmul.bf16.gmra.mxu0 %v170
    %v248 = vpop.f32.mrf.mxu0
    %v249 = vadd.f32 %v190, %v248
    %v250 = vpop.f32.mrf.mxu0
    %251 = vdwg.mxu0
    %v252 = vrot.slane %v249, 4
    %v253 = vadd.f32 %v249, %v252
    %v254 = vrot.slane %v253, 2
    %v255 = vadd.f32 %v253, %v254
    %v256 = vrot.slane %v255, 1
    %v257 = vadd.f32 %v255, %v256
    %v258 = vmul.f32 %v257, %v140
    %v259 = vsub.f32 %v249, %v258
    %v260 = vmul.f32 %v259, %v259
    %v261 = vrot.slane %v260, 4
    %v262 = vadd.f32 %v260, %v261
    %v263 = vrot.slane %v262, 2
    %v264 = vadd.f32 %v262, %v263
    %v265 = vrot.slane %v264, 1
    %v266 = vadd.f32 %v264, %v265
    %v267 = vmul.f32 %v266, %v140
    %v268 = vadd.f32 %v267, 0.001
    %v269 = vrsqrt.pop %v268
    %v270 = vmul.f32 %v269, %v268
    %v271 = vmul.f32 %v270, %v269
    %v272 = vmul.f32 0.5, %v271
    %v273 = vsub.f32 1.5, %v272
    %v274 = vmul.f32 %v269, %v273
    %vm275 = vweird.f32 %v268
    %vm276 = vweird.f32 %v269
    %vm277 = vmor %vm275, %vm276
    %v278 = vsel %vm277, %v269, %v274
    %v279 = vmul.f32 %v188, %v278
    %v280 = vmul.f32 %v258, %v279
    %v281 = vsub.f32 %v189, %v280
    %v282 = vperm.slane %v279, 0
    %v283 = vmul.f32 %v249, %v282
    %v284 = vperm.slane %v281, 0
    %v285 = vadd.f32 %v283, %v284
    %v286 = vmax.f32 %v285, 0.0
    %v287 = vpack.c.bf16 %v286, %v286
    %v288 = vld [vmem:[#allocation2 + $0x80] sm:$0xf]
    %v289 = vld [vmem:[#allocation2 + $0x84] sm:$0xf]
    %v290 = vld [vmem:[#allocation2 + $0x88] sm:$0xf]
    %v291 = vld [vmem:[#allocation2 + $0x8c] sm:$0xf]
    %v292 = vld [vmem:[#allocation2 + $0x90] sm:$0xf]
    %v293 = vld [vmem:[#allocation2 + $0x94] sm:$0xf]
    %v294 = vld [vmem:[#allocation2 + $0x98] sm:$0xf]
    %v295 = vld [vmem:[#allocation2 + $0x9c] sm:$0xf]
    %v296 = vld [vmem:[#allocation2 + $0xa0] sm:$0xf]
    %v297 = vld [vmem:[#allocation2 + $0xa4] sm:$0xf]
    %v298 = vld [vmem:[#allocation2 + $0xa8] sm:$0xf]
    %v299 = vld [vmem:[#allocation2 + $0xac] sm:$0xf]
    %v300 = vld [vmem:[#allocation2 + $0xb0] sm:$0xf]
    %v301 = vld [vmem:[#allocation2 + $0xb4] sm:$0xf]
    %v302 = vld [vmem:[#allocation2 + $0xb8] sm:$0xf]
    %v303 = vld [vmem:[#allocation2 + $0xbc] sm:$0xf]
    %v304 = vld [vmem:[#allocation4 + $0x6] sm:$0x1]
    %v305 = vld [vmem:[#allocation4 + $0x7] sm:$0x1]
    %v306 = vld [vmem:[#allocation4 + $0x8] sm:$0x1]
    %v307 = vperm.slane %v304, 0
    %v324 = vunpack.c.l.b16 %v288
    %v325 = vunpack.c.l.b16 %v289
    %v326 = vunpack.c.l.b16 %v290
    %v327 = vunpack.c.l.b16 %v291
    %v328 = vunpack.c.l.b16 %v292
    %v329 = vunpack.c.l.b16 %v293
    %v330 = vunpack.c.l.b16 %v294
    %v331 = vunpack.c.l.b16 %v295
    %v332 = vunpack.c.l.b16 %v296
    %v333 = vunpack.c.l.b16 %v297
    %v334 = vunpack.c.l.b16 %v298
    %v335 = vunpack.c.l.b16 %v299
    %v336 = vunpack.c.l.b16 %v300
    %v337 = vunpack.c.l.b16 %v301
    %v338 = vunpack.c.l.b16 %v302
    %v339 = vunpack.c.l.b16 %v303
    %v340 = vpack.c.b16 %v325, %v324
    %v341 = vpack.c.b16 %v327, %v326
    %v342 = vpack.c.b16 %v329, %v328
    %v343 = vpack.c.b16 %v331, %v330
    %v344 = vpack.c.b16 %v333, %v332
    %v345 = vpack.c.b16 %v335, %v334
    %v346 = vpack.c.b16 %v337, %v336
    %v347 = vpack.c.b16 %v339, %v338
    %356 = vmatpush.bf16.msra.mxu0 %v347
    %357 = vmatpush.bf16.msra.mxu0 %v346
    %358 = vmatpush.bf16.msra.mxu0 %v345
    %359 = vmatpush.bf16.msra.mxu0 %v344
    %360 = vmatpush.bf16.msra.mxu0 %v343
    %361 = vmatpush.bf16.msra.mxu0 %v342
    %362 = vmatpush.bf16.msra.mxu0 %v341
    %363 = vmatpush.bf16.msra.mxu0 %v340
    %364 = vmatmul.bf16.gmra.mxu0 %v287
    %v365 = vpop.f32.mrf.mxu0
    %v366 = vadd.f32 %v307, %v365
    %v367 = vpop.f32.mrf.mxu0
    %368 = vdwg.mxu0
    %v369 = vrot.slane %v366, 4
    %v370 = vadd.f32 %v366, %v369
    %v371 = vrot.slane %v370, 2
    %v372 = vadd.f32 %v370, %v371
    %v373 = vrot.slane %v372, 1
    %v374 = vadd.f32 %v372, %v373
    %v375 = vmul.f32 %v374, %v140
    %v376 = vsub.f32 %v366, %v375
    %v377 = vmul.f32 %v376, %v376
    %v378 = vrot.slane %v377, 4
    %v379 = vadd.f32 %v377, %v378
    %v380 = vrot.slane %v379, 2
    %v381 = vadd.f32 %v379, %v380
    %v382 = vrot.slane %v381, 1
    %v383 = vadd.f32 %v381, %v382
    %v384 = vmul.f32 %v383, %v140
    %v385 = vadd.f32 %v384, 0.001
    %v386 = vrsqrt.pop %v385
    %v387 = vmul.f32 %v386, %v385
    %v388 = vmul.f32 %v387, %v386
    %v389 = vmul.f32 0.5, %v388
    %v390 = vsub.f32 1.5, %v389
    %v391 = vmul.f32 %v386, %v390
    %vm392 = vweird.f32 %v385
    %vm393 = vweird.f32 %v386
    %vm394 = vmor %vm392, %vm393
    %v395 = vsel %vm394, %v386, %v391
    %v396 = vmul.f32 %v305, %v395
    %v397 = vmul.f32 %v375, %v396
    %v398 = vsub.f32 %v306, %v397
    %v399 = vperm.slane %v396, 0
    %v400 = vmul.f32 %v366, %v399
    %v401 = vperm.slane %v398, 0
    %v402 = vadd.f32 %v400, %v401
    %v403 = vmax.f32 %v402, 0.0
    %v404 = vpack.c.bf16 %v403, %v403
    %v405 = vld [vmem:[#allocation2 + $0xc0] sm:$0xf]
    %v406 = vld [vmem:[#allocation2 + $0xc4] sm:$0xf]
    %v407 = vld [vmem:[#allocation2 + $0xc8] sm:$0xf]
    %v408 = vld [vmem:[#allocation2 + $0xcc] sm:$0xf]
    %v409 = vld [vmem:[#allocation2 + $0xd0] sm:$0xf]
    %v410 = vld [vmem:[#allocation2 + $0xd4] sm:$0xf]
    %v411 = vld [vmem:[#allocation2 + $0xd8] sm:$0xf]
    %v412 = vld [vmem:[#allocation2 + $0xdc] sm:$0xf]
    %v413 = vld [vmem:[#allocation2 + $0xe0] sm:$0xf]
    %v414 = vld [vmem:[#allocation2 + $0xe4] sm:$0xf]
    %v415 = vld [vmem:[#allocation2 + $0xe8] sm:$0xf]
    %v416 = vld [vmem:[#allocation2 + $0xec] sm:$0xf]
    %v417 = vld [vmem:[#allocation2 + $0xf0] sm:$0xf]
    %v418 = vld [vmem:[#allocation2 + $0xf4] sm:$0xf]
    %v419 = vld [vmem:[#allocation2 + $0xf8] sm:$0xf]
    %v420 = vld [vmem:[#allocation2 + $0xfc] sm:$0xf]
    %v421 = vld [vmem:[#allocation4 + $0x9] sm:$0x1]
    %v422 = vld [vmem:[#allocation4 + $0xa] sm:$0x1]
    %v423 = vld [vmem:[#allocation4 + $0xb] sm:$0x1]
    %v424 = vperm.slane %v421, 0
    %v441 = vunpack.c.l.b16 %v405
    %v442 = vunpack.c.l.b16 %v406
    %v443 = vunpack.c.l.b16 %v407
    %v444 = vunpack.c.l.b16 %v408
    %v445 = vunpack.c.l.b16 %v409
    %v446 = vunpack.c.l.b16 %v410
    %v447 = vunpack.c.l.b16 %v411
    %v448 = vunpack.c.l.b16 %v412
    %v449 = vunpack.c.l.b16 %v413
    %v450 = vunpack.c.l.b16 %v414
    %v451 = vunpack.c.l.b16 %v415
    %v452 = vunpack.c.l.b16 %v416
    %v453 = vunpack.c.l.b16 %v417
    %v454 = vunpack.c.l.b16 %v418
    %v455 = vunpack.c.l.b16 %v419
    %v456 = vunpack.c.l.b16 %v420
    %v457 = vpack.c.b16 %v442, %v441
    %v458 = vpack.c.b16 %v444, %v443
    %v459 = vpack.c.b16 %v446, %v445
    %v460 = vpack.c.b16 %v448, %v447
    %v461 = vpack.c.b16 %v450, %v449
    %v462 = vpack.c.b16 %v452, %v451
    %v463 = vpack.c.b16 %v454, %v453
    %v464 = vpack.c.b16 %v456, %v455
    %473 = vmatpush.bf16.msra.mxu0 %v464
    %474 = vmatpush.bf16.msra.mxu0 %v463
    %475 = vmatpush.bf16.msra.mxu0 %v462
    %476 = vmatpush.bf16.msra.mxu0 %v461
    %477 = vmatpush.bf16.msra.mxu0 %v460
    %478 = vmatpush.bf16.msra.mxu0 %v459
    %479 = vmatpush.bf16.msra.mxu0 %v458
    %480 = vmatpush.bf16.msra.mxu0 %v457
    %481 = vmatmul.bf16.gmra.mxu0 %v404
    %v482 = vpop.f32.mrf.mxu0
    %v483 = vadd.f32 %v424, %v482
    %v484 = vpop.f32.mrf.mxu0
    %485 = vdwg.mxu0
    %v486 = vrot.slane %v483, 4
    %v487 = vadd.f32 %v483, %v486
    %v488 = vrot.slane %v487, 2
    %v489 = vadd.f32 %v487, %v488
    %v490 = vrot.slane %v489, 1
    %v491 = vadd.f32 %v489, %v490
    %v492 = vmul.f32 %v491, %v140
    %v493 = vsub.f32 %v483, %v492
    %v494 = vmul.f32 %v493, %v493
    %v495 = vrot.slane %v494, 4
    %v496 = vadd.f32 %v494, %v495
    %v497 = vrot.slane %v496, 2
    %v498 = vadd.f32 %v496, %v497
    %v499 = vrot.slane %v498, 1
    %v500 = vadd.f32 %v498, %v499
    %v501 = vmul.f32 %v500, %v140
    %v502 = vadd.f32 %v501, 0.001
    %v503 = vrsqrt.pop %v502
    %v504 = vmul.f32 %v503, %v502
    %v505 = vmul.f32 %v504, %v503
    %v506 = vmul.f32 0.5, %v505
    %v507 = vsub.f32 1.5, %v506
    %v508 = vmul.f32 %v503, %v507
    %vm509 = vweird.f32 %v502
    %vm510 = vweird.f32 %v503
    %vm511 = vmor %vm509, %vm510
    %v512 = vsel %vm511, %v503, %v508
    %v513 = vmul.f32 %v422, %v512
    %v514 = vmul.f32 %v492, %v513
    %v515 = vsub.f32 %v423, %v514
    %v516 = vperm.slane %v513, 0
    %v517 = vmul.f32 %v483, %v516
    %v518 = vperm.slane %v515, 0
    %v519 = vadd.f32 %v517, %v518
    %v520 = vmax.f32 %v519, 0.0
    %v521 = vpack.c.bf16 %v520, %v520
    %v522 = vld [vmem:[#allocation2 + $0x100] sm:$0xf]
    %v523 = vld [vmem:[#allocation2 + $0x104] sm:$0xf]
    %v524 = vld [vmem:[#allocation2 + $0x108] sm:$0xf]
    %v525 = vld [vmem:[#allocation2 + $0x10c] sm:$0xf]
    %v526 = vld [vmem:[#allocation2 + $0x110] sm:$0xf]
    %v527 = vld [vmem:[#allocation2 + $0x114] sm:$0xf]
    %v528 = vld [vmem:[#allocation2 + $0x118] sm:$0xf]
    %v529 = vld [vmem:[#allocation2 + $0x11c] sm:$0xf]
    %v530 = vld [vmem:[#allocation2 + $0x120] sm:$0xf]
    %v531 = vld [vmem:[#allocation2 + $0x124] sm:$0xf]
    %v532 = vld [vmem:[#allocation2 + $0x128] sm:$0xf]
    %v533 = vld [vmem:[#allocation2 + $0x12c] sm:$0xf]
    %v534 = vld [vmem:[#allocation2 + $0x130] sm:$0xf]
    %v535 = vld [vmem:[#allocation2 + $0x134] sm:$0xf]
    %v536 = vld [vmem:[#allocation2 + $0x138] sm:$0xf]
    %v537 = vld [vmem:[#allocation2 + $0x13c] sm:$0xf]
    %v538 = vld [vmem:[#allocation4 + $0xc] sm:$0x1]
    %v539 = vld [vmem:[#allocation4 + $0xd] sm:$0x1]
    %v540 = vld [vmem:[#allocation4 + $0xe] sm:$0x1]
    %v541 = vperm.slane %v538, 0
    %v558 = vunpack.c.l.b16 %v522
    %v559 = vunpack.c.l.b16 %v523
    %v560 = vunpack.c.l.b16 %v524
    %v561 = vunpack.c.l.b16 %v525
    %v562 = vunpack.c.l.b16 %v526
    %v563 = vunpack.c.l.b16 %v527
    %v564 = vunpack.c.l.b16 %v528
    %v565 = vunpack.c.l.b16 %v529
    %v566 = vunpack.c.l.b16 %v530
    %v567 = vunpack.c.l.b16 %v531
    %v568 = vunpack.c.l.b16 %v532
    %v569 = vunpack.c.l.b16 %v533
    %v570 = vunpack.c.l.b16 %v534
    %v571 = vunpack.c.l.b16 %v535
    %v572 = vunpack.c.l.b16 %v536
    %v573 = vunpack.c.l.b16 %v537
    %v574 = vpack.c.b16 %v559, %v558
    %v575 = vpack.c.b16 %v561, %v560
    %v576 = vpack.c.b16 %v563, %v562
    %v577 = vpack.c.b16 %v565, %v564
    %v578 = vpack.c.b16 %v567, %v566
    %v579 = vpack.c.b16 %v569, %v568
    %v580 = vpack.c.b16 %v571, %v570
    %v581 = vpack.c.b16 %v573, %v572
    %590 = vmatpush.bf16.msra.mxu0 %v581
    %591 = vmatpush.bf16.msra.mxu0 %v580
    %592 = vmatpush.bf16.msra.mxu0 %v579
    %593 = vmatpush.bf16.msra.mxu0 %v578
    %594 = vmatpush.bf16.msra.mxu0 %v577
    %595 = vmatpush.bf16.msra.mxu0 %v576
    %596 = vmatpush.bf16.msra.mxu0 %v575
    %597 = vmatpush.bf16.msra.mxu0 %v574
    %598 = vmatmul.bf16.gmra.mxu0 %v521
    %v599 = vpop.f32.mrf.mxu0
    %v600 = vadd.f32 %v541, %v599
    %v601 = vpop.f32.mrf.mxu0
    %602 = vdwg.mxu0
    %v603 = vrot.slane %v600, 4
    %v604 = vadd.f32 %v600, %v603
    %v605 = vrot.slane %v604, 2
    %v606 = vadd.f32 %v604, %v605
    %v607 = vrot.slane %v606, 1
    %v608 = vadd.f32 %v606, %v607
    %v609 = vmul.f32 %v608, %v140
    %v610 = vsub.f32 %v600, %v609
    %v611 = vmul.f32 %v610, %v610
    %v612 = vrot.slane %v611, 4
    %v613 = vadd.f32 %v611, %v612
    %v614 = vrot.slane %v613, 2
    %v615 = vadd.f32 %v613, %v614
    %v616 = vrot.slane %v615, 1
    %v617 = vadd.f32 %v615, %v616
    %v618 = vmul.f32 %v617, %v140
    %v619 = vadd.f32 %v618, 0.001
    %v620 = vrsqrt.pop %v619
    %v621 = vmul.f32 %v620, %v619
    %v622 = vmul.f32 %v621, %v620
    %v623 = vmul.f32 0.5, %v622
    %v624 = vsub.f32 1.5, %v623
    %v625 = vmul.f32 %v620, %v624
    %vm626 = vweird.f32 %v619
    %vm627 = vweird.f32 %v620
    %vm628 = vmor %vm626, %vm627
    %v629 = vsel %vm628, %v620, %v625
    %v630 = vmul.f32 %v539, %v629
    %v631 = vmul.f32 %v609, %v630
    %v632 = vsub.f32 %v540, %v631
    %v633 = vperm.slane %v630, 0
    %v634 = vmul.f32 %v600, %v633
    %v635 = vperm.slane %v632, 0
    %v636 = vadd.f32 %v634, %v635
    %v637 = vmax.f32 %v636, 0.0
    %638 = vst [vmem:[%s3 + $0x8] sm:$0xff] %v637
    %v639 = vpack.c.bf16 %v637, %v637
    %v640 = vld [vmem:[#allocation2 + $0x140] sm:$0xf]
    %v641 = vld [vmem:[#allocation2 + $0x144] sm:$0xf]
    %v642 = vld [vmem:[#allocation2 + $0x148] sm:$0xf]
    %v643 = vld [vmem:[#allocation2 + $0x14c] sm:$0xf]
    %v644 = vld [vmem:[#allocation2 + $0x150] sm:$0xf]
    %v645 = vld [vmem:[#allocation2 + $0x154] sm:$0xf]
    %v646 = vld [vmem:[#allocation2 + $0x158] sm:$0xf]
    %v647 = vld [vmem:[#allocation2 + $0x15c] sm:$0xf]
    %v648 = vld [vmem:[#allocation2 + $0x160] sm:$0xf]
    %v649 = vld [vmem:[#allocation2 + $0x164] sm:$0xf]
    %v650 = vld [vmem:[#allocation2 + $0x168] sm:$0xf]
    %v651 = vld [vmem:[#allocation2 + $0x16c] sm:$0xf]
    %v652 = vld [vmem:[#allocation2 + $0x170] sm:$0xf]
    %v653 = vld [vmem:[#allocation2 + $0x174] sm:$0xf]
    %v654 = vld [vmem:[#allocation2 + $0x178] sm:$0xf]
    %v655 = vld [vmem:[#allocation2 + $0x17c] sm:$0xf]
    %v656 = vld [vmem:[#allocation4 + $0xf] sm:$0x1]
    %v657 = vld [vmem:[#allocation4 + $0x10] sm:$0x1]
    %v658 = vld [vmem:[#allocation4 + $0x11] sm:$0x1]
    %v659 = vperm.slane %v656, 0
    %v676 = vunpack.c.l.b16 %v640
    %v677 = vunpack.c.l.b16 %v641
    %v678 = vunpack.c.l.b16 %v642
    %v679 = vunpack.c.l.b16 %v643
    %v680 = vunpack.c.l.b16 %v644
    %v681 = vunpack.c.l.b16 %v645
    %v682 = vunpack.c.l.b16 %v646
    %v683 = vunpack.c.l.b16 %v647
    %v684 = vunpack.c.l.b16 %v648
    %v685 = vunpack.c.l.b16 %v649
    %v686 = vunpack.c.l.b16 %v650
    %v687 = vunpack.c.l.b16 %v651
    %v688 = vunpack.c.l.b16 %v652
    %v689 = vunpack.c.l.b16 %v653
    %v690 = vunpack.c.l.b16 %v654
    %v691 = vunpack.c.l.b16 %v655
    %v692 = vpack.c.b16 %v677, %v676
    %v693 = vpack.c.b16 %v679, %v678
    %v694 = vpack.c.b16 %v681, %v680
    %v695 = vpack.c.b16 %v683, %v682
    %v696 = vpack.c.b16 %v685, %v684
    %v697 = vpack.c.b16 %v687, %v686
    %v698 = vpack.c.b16 %v689, %v688
    %v699 = vpack.c.b16 %v691, %v690
    %708 = vmatpush.bf16.msra.mxu0 %v699
    %709 = vmatpush.bf16.msra.mxu0 %v698
    %710 = vmatpush.bf16.msra.mxu0 %v697
    %711 = vmatpush.bf16.msra.mxu0 %v696
    %712 = vmatpush.bf16.msra.mxu0 %v695
    %713 = vmatpush.bf16.msra.mxu0 %v694
    %714 = vmatpush.bf16.msra.mxu0 %v693
    %715 = vmatpush.bf16.msra.mxu0 %v692
    %716 = vmatmul.bf16.gmra.mxu0 %v639
    %v717 = vpop.f32.mrf.mxu0
    %v718 = vadd.f32 %v659, %v717
    %v719 = vpop.f32.mrf.mxu0
    %720 = vdwg.mxu0
    %v721 = vrot.slane %v718, 4
    %v722 = vadd.f32 %v718, %v721
    %v723 = vrot.slane %v722, 2
    %v724 = vadd.f32 %v722, %v723
    %v725 = vrot.slane %v724, 1
    %v726 = vadd.f32 %v724, %v725
    %v727 = vmul.f32 %v726, %v140
    %v728 = vsub.f32 %v718, %v727
    %v729 = vmul.f32 %v728, %v728
    %v730 = vrot.slane %v729, 4
    %v731 = vadd.f32 %v729, %v730
    %v732 = vrot.slane %v731, 2
    %v733 = vadd.f32 %v731, %v732
    %v734 = vrot.slane %v733, 1
    %v735 = vadd.f32 %v733, %v734
    %v736 = vmul.f32 %v735, %v140
    %v737 = vadd.f32 %v736, 0.001
    %v738 = vrsqrt.pop %v737
    %v739 = vmul.f32 %v738, %v737
    %v740 = vmul.f32 %v739, %v738
    %v741 = vmul.f32 0.5, %v740
    %v742 = vsub.f32 1.5, %v741
    %v743 = vmul.f32 %v738, %v742
    %vm744 = vweird.f32 %v737
    %vm745 = vweird.f32 %v738
    %vm746 = vmor %vm744, %vm745
    %v747 = vsel %vm746, %v738, %v743
    %v748 = vmul.f32 %v657, %v747
    %v749 = vmul.f32 %v727, %v748
    %v750 = vsub.f32 %v658, %v749
    %v751 = vperm.slane %v748, 0
    %v752 = vmul.f32 %v718, %v751
    %v753 = vperm.slane %v750, 0
    %v754 = vadd.f32 %v752, %v753
    %v755 = vmax.f32 %v754, 0.0
    %v756 = vpack.c.bf16 %v755, %v755
    %v757 = vld [vmem:[#allocation2 + $0x180] sm:$0xf]
    %v758 = vld [vmem:[#allocation2 + $0x184] sm:$0xf]
    %v759 = vld [vmem:[#allocation2 + $0x188] sm:$0xf]
    %v760 = vld [vmem:[#allocation2 + $0x18c] sm:$0xf]
    %v761 = vld [vmem:[#allocation2 + $0x190] sm:$0xf]
    %v762 = vld [vmem:[#allocation2 + $0x194] sm:$0xf]
    %v763 = vld [vmem:[#allocation2 + $0x198] sm:$0xf]
    %v764 = vld [vmem:[#allocation2 + $0x19c] sm:$0xf]
    %v765 = vld [vmem:[#allocation2 + $0x1a0] sm:$0xf]
    %v766 = vld [vmem:[#allocation2 + $0x1a4] sm:$0xf]
    %v767 = vld [vmem:[#allocation2 + $0x1a8] sm:$0xf]
    %v768 = vld [vmem:[#allocation2 + $0x1ac] sm:$0xf]
    %v769 = vld [vmem:[#allocation2 + $0x1b0] sm:$0xf]
    %v770 = vld [vmem:[#allocation2 + $0x1b4] sm:$0xf]
    %v771 = vld [vmem:[#allocation2 + $0x1b8] sm:$0xf]
    %v772 = vld [vmem:[#allocation2 + $0x1bc] sm:$0xf]
    %v773 = vld [vmem:[#allocation4 + $0x12] sm:$0x1]
    %v774 = vld [vmem:[#allocation4 + $0x13] sm:$0x1]
    %v775 = vld [vmem:[#allocation4 + $0x14] sm:$0x1]
    %v776 = vperm.slane %v773, 0
    %v793 = vunpack.c.l.b16 %v757
    %v794 = vunpack.c.l.b16 %v758
    %v795 = vunpack.c.l.b16 %v759
    %v796 = vunpack.c.l.b16 %v760
    %v797 = vunpack.c.l.b16 %v761
    %v798 = vunpack.c.l.b16 %v762
    %v799 = vunpack.c.l.b16 %v763
    %v800 = vunpack.c.l.b16 %v764
    %v801 = vunpack.c.l.b16 %v765
    %v802 = vunpack.c.l.b16 %v766
    %v803 = vunpack.c.l.b16 %v767
    %v804 = vunpack.c.l.b16 %v768
    %v805 = vunpack.c.l.b16 %v769
    %v806 = vunpack.c.l.b16 %v770
    %v807 = vunpack.c.l.b16 %v771
    %v808 = vunpack.c.l.b16 %v772
    %v809 = vpack.c.b16 %v794, %v793
    %v810 = vpack.c.b16 %v796, %v795
    %v811 = vpack.c.b16 %v798, %v797
    %v812 = vpack.c.b16 %v800, %v799
    %v813 = vpack.c.b16 %v802, %v801
    %v814 = vpack.c.b16 %v804, %v803
    %v815 = vpack.c.b16 %v806, %v805
    %v816 = vpack.c.b16 %v808, %v807
    %825 = vmatpush.bf16.msra.mxu0 %v816
    %826 = vmatpush.bf16.msra.mxu0 %v815
    %827 = vmatpush.bf16.msra.mxu0 %v814
    %828 = vmatpush.bf16.msra.mxu0 %v813
    %829 = vmatpush.bf16.msra.mxu0 %v812
    %830 = vmatpush.bf16.msra.mxu0 %v811
    %831 = vmatpush.bf16.msra.mxu0 %v810
    %832 = vmatpush.bf16.msra.mxu0 %v809
    %833 = vmatmul.bf16.gmra.mxu0 %v756
    %v834 = vpop.f32.mrf.mxu0
    %v835 = vadd.f32 %v776, %v834
    %v836 = vpop.f32.mrf.mxu0
    %837 = vdwg.mxu0
    %v838 = vrot.slane %v835, 4
    %v839 = vadd.f32 %v835, %v838
    %v840 = vrot.slane %v839, 2
    %v841 = vadd.f32 %v839, %v840
    %v842 = vrot.slane %v841, 1
    %v843 = vadd.f32 %v841, %v842
    %v844 = vmul.f32 %v843, %v140
    %v845 = vsub.f32 %v835, %v844
    %v846 = vmul.f32 %v845, %v845
    %v847 = vrot.slane %v846, 4
    %v848 = vadd.f32 %v846, %v847
    %v849 = vrot.slane %v848, 2
    %v850 = vadd.f32 %v848, %v849
    %v851 = vrot.slane %v850, 1
    %v852 = vadd.f32 %v850, %v851
    %v853 = vmul.f32 %v852, %v140
    %v854 = vadd.f32 %v853, 0.001
    %v855 = vrsqrt.pop %v854
    %v856 = vmul.f32 %v855, %v854
    %v857 = vmul.f32 %v856, %v855
    %v858 = vmul.f32 0.5, %v857
    %v859 = vsub.f32 1.5, %v858
    %v860 = vmul.f32 %v855, %v859
    %vm861 = vweird.f32 %v854
    %vm862 = vweird.f32 %v855
    %vm863 = vmor %vm861, %vm862
    %v864 = vsel %vm863, %v855, %v860
    %v865 = vmul.f32 %v774, %v864
    %v866 = vmul.f32 %v844, %v865
    %v867 = vsub.f32 %v775, %v866
    %v868 = vperm.slane %v865, 0
    %v869 = vmul.f32 %v835, %v868
    %v870 = vperm.slane %v867, 0
    %v871 = vadd.f32 %v869, %v870
    %v872 = vmax.f32 %v871, 0.0
    %v873 = vpack.c.bf16 %v872, %v872
    %v874 = vld [vmem:[#allocation2 + $0x1c0] sm:$0xf]
    %v875 = vld [vmem:[#allocation2 + $0x1c4] sm:$0xf]
    %v876 = vld [vmem:[#allocation2 + $0x1c8] sm:$0xf]
    %v877 = vld [vmem:[#allocation2 + $0x1cc] sm:$0xf]
    %v878 = vld [vmem:[#allocation2 + $0x1d0] sm:$0xf]
    %v879 = vld [vmem:[#allocation2 + $0x1d4] sm:$0xf]
    %v880 = vld [vmem:[#allocation2 + $0x1d8] sm:$0xf]
    %v881 = vld [vmem:[#allocation2 + $0x1dc] sm:$0xf]
    %v882 = vld [vmem:[#allocation2 + $0x1e0] sm:$0xf]
    %v883 = vld [vmem:[#allocation2 + $0x1e4] sm:$0xf]
    %v884 = vld [vmem:[#allocation2 + $0x1e8] sm:$0xf]
    %v885 = vld [vmem:[#allocation2 + $0x1ec] sm:$0xf]
    %v886 = vld [vmem:[#allocation2 + $0x1f0] sm:$0xf]
    %v887 = vld [vmem:[#allocation2 + $0x1f4] sm:$0xf]
    %v888 = vld [vmem:[#allocation2 + $0x1f8] sm:$0xf]
    %v889 = vld [vmem:[#allocation2 + $0x1fc] sm:$0xf]
    %v890 = vld [vmem:[#allocation4 + $0x15] sm:$0x1]
    %v891 = vld [vmem:[#allocation4 + $0x16] sm:$0x1]
    %v892 = vld [vmem:[#allocation4 + $0x17] sm:$0x1]
    %v893 = vperm.slane %v890, 0
    %v910 = vunpack.c.l.b16 %v874
    %v911 = vunpack.c.l.b16 %v875
    %v912 = vunpack.c.l.b16 %v876
    %v913 = vunpack.c.l.b16 %v877
    %v914 = vunpack.c.l.b16 %v878
    %v915 = vunpack.c.l.b16 %v879
    %v916 = vunpack.c.l.b16 %v880
    %v917 = vunpack.c.l.b16 %v881
    %v918 = vunpack.c.l.b16 %v882
    %v919 = vunpack.c.l.b16 %v883
    %v920 = vunpack.c.l.b16 %v884
    %v921 = vunpack.c.l.b16 %v885
    %v922 = vunpack.c.l.b16 %v886
    %v923 = vunpack.c.l.b16 %v887
    %v924 = vunpack.c.l.b16 %v888
    %v925 = vunpack.c.l.b16 %v889
    %v926 = vpack.c.b16 %v911, %v910
    %v927 = vpack.c.b16 %v913, %v912
    %v928 = vpack.c.b16 %v915, %v914
    %v929 = vpack.c.b16 %v917, %v916
    %v930 = vpack.c.b16 %v919, %v918
    %v931 = vpack.c.b16 %v921, %v920
    %v932 = vpack.c.b16 %v923, %v922
    %v933 = vpack.c.b16 %v925, %v924
    %942 = vmatpush.bf16.msra.mxu0 %v933
    %943 = vmatpush.bf16.msra.mxu0 %v932
    %944 = vmatpush.bf16.msra.mxu0 %v931
    %945 = vmatpush.bf16.msra.mxu0 %v930
    %946 = vmatpush.bf16.msra.mxu0 %v929
    %947 = vmatpush.bf16.msra.mxu0 %v928
    %948 = vmatpush.bf16.msra.mxu0 %v927
    %949 = vmatpush.bf16.msra.mxu0 %v926
    %950 = vmatmul.bf16.gmra.mxu0 %v873
    %v951 = vpop.f32.mrf.mxu0
    %v952 = vadd.f32 %v893, %v951
    %v953 = vpop.f32.mrf.mxu0
    %954 = vdwg.mxu0
    %v955 = vrot.slane %v952, 4
    %v956 = vadd.f32 %v952, %v955
    %v957 = vrot.slane %v956, 2
    %v958 = vadd.f32 %v956, %v957
    %v959 = vrot.slane %v958, 1
    %v960 = vadd.f32 %v958, %v959
    %v961 = vmul.f32 %v960, %v140
    %v962 = vsub.f32 %v952, %v961
    %v963 = vmul.f32 %v962, %v962
    %v964 = vrot.slane %v963, 4
    %v965 = vadd.f32 %v963, %v964
    %v966 = vrot.slane %v965, 2
    %v967 = vadd.f32 %v965, %v966
    %v968 = vrot.slane %v967, 1
    %v969 = vadd.f32 %v967, %v968
    %v970 = vmul.f32 %v969, %v140
    %v971 = vadd.f32 %v970, 0.001
    %v972 = vrsqrt.pop %v971
    %v973 = vmul.f32 %v972, %v971
    %v974 = vmul.f32 %v973, %v972
    %v975 = vmul.f32 0.5, %v974
    %v976 = vsub.f32 1.5, %v975
    %v977 = vmul.f32 %v972, %v976
    %vm978 = vweird.f32 %v971
    %vm979 = vweird.f32 %v972
    %vm980 = vmor %vm978, %vm979
    %v981 = vsel %vm980, %v972, %v977
    %v982 = vmul.f32 %v891, %v981
    %v983 = vmul.f32 %v961, %v982
    %v984 = vsub.f32 %v892, %v983
    %v985 = vperm.slane %v982, 0
    %v986 = vmul.f32 %v952, %v985
    %v987 = vperm.slane %v984, 0
    %v988 = vadd.f32 %v986, %v987
    %v989 = vmax.f32 %v988, 0.0
    %v990 = vpack.c.bf16 %v989, %v989
    %v991 = vld [vmem:[#allocation2 + $0x200] sm:$0xf]
    %v992 = vld [vmem:[#allocation2 + $0x204] sm:$0xf]
    %v993 = vld [vmem:[#allocation2 + $0x208] sm:$0xf]
    %v994 = vld [vmem:[#allocation2 + $0x20c] sm:$0xf]
    %v995 = vld [vmem:[#allocation2 + $0x210] sm:$0xf]
    %v996 = vld [vmem:[#allocation2 + $0x214] sm:$0xf]
    %v997 = vld [vmem:[#allocation2 + $0x218] sm:$0xf]
    %v998 = vld [vmem:[#allocation2 + $0x21c] sm:$0xf]
    %v999 = vld [vmem:[#allocation2 + $0x220] sm:$0xf]
    %v1000 = vld [vmem:[#allocation2 + $0x224] sm:$0xf]
    %v1001 = vld [vmem:[#allocation2 + $0x228] sm:$0xf]
    %v1002 = vld [vmem:[#allocation2 + $0x22c] sm:$0xf]
    %v1003 = vld [vmem:[#allocation2 + $0x230] sm:$0xf]
    %v1004 = vld [vmem:[#allocation2 + $0x234] sm:$0xf]
    %v1005 = vld [vmem:[#allocation2 + $0x238] sm:$0xf]
    %v1006 = vld [vmem:[#allocation2 + $0x23c] sm:$0xf]
    %v1007 = vld [vmem:[#allocation4 + $0x18] sm:$0x1]
    %v1008 = vld [vmem:[#allocation4 + $0x19] sm:$0x1]
    %v1009 = vld [vmem:[#allocation4 + $0x1a] sm:$0x1]
    %v1010 = vperm.slane %v1007, 0
    %v1027 = vunpack.c.l.b16 %v991
    %v1028 = vunpack.c.l.b16 %v992
    %v1029 = vunpack.c.l.b16 %v993
    %v1030 = vunpack.c.l.b16 %v994
    %v1031 = vunpack.c.l.b16 %v995
    %v1032 = vunpack.c.l.b16 %v996
    %v1033 = vunpack.c.l.b16 %v997
    %v1034 = vunpack.c.l.b16 %v998
    %v1035 = vunpack.c.l.b16 %v999
    %v1036 = vunpack.c.l.b16 %v1000
    %v1037 = vunpack.c.l.b16 %v1001
    %v1038 = vunpack.c.l.b16 %v1002
    %v1039 = vunpack.c.l.b16 %v1003
    %v1040 = vunpack.c.l.b16 %v1004
    %v1041 = vunpack.c.l.b16 %v1005
    %v1042 = vunpack.c.l.b16 %v1006
    %v1043 = vpack.c.b16 %v1028, %v1027
    %v1044 = vpack.c.b16 %v1030, %v1029
    %v1045 = vpack.c.b16 %v1032, %v1031
    %v1046 = vpack.c.b16 %v1034, %v1033
    %v1047 = vpack.c.b16 %v1036, %v1035
    %v1048 = vpack.c.b16 %v1038, %v1037
    %v1049 = vpack.c.b16 %v1040, %v1039
    %v1050 = vpack.c.b16 %v1042, %v1041
    %1059 = vmatpush.bf16.msra.mxu0 %v1050
    %1060 = vmatpush.bf16.msra.mxu0 %v1049
    %1061 = vmatpush.bf16.msra.mxu0 %v1048
    %1062 = vmatpush.bf16.msra.mxu0 %v1047
    %1063 = vmatpush.bf16.msra.mxu0 %v1046
    %1064 = vmatpush.bf16.msra.mxu0 %v1045
    %1065 = vmatpush.bf16.msra.mxu0 %v1044
    %1066 = vmatpush.bf16.msra.mxu0 %v1043
    %1067 = vmatmul.bf16.gmra.mxu0 %v990
    %v1068 = vpop.f32.mrf.mxu0
    %v1069 = vadd.f32 %v1010, %v1068
    %v1070 = vpop.f32.mrf.mxu0
    %1071 = vdwg.mxu0
    %v1072 = vrot.slane %v1069, 4
    %v1073 = vadd.f32 %v1069, %v1072
    %v1074 = vrot.slane %v1073, 2
    %v1075 = vadd.f32 %v1073, %v1074
    %v1076 = vrot.slane %v1075, 1
    %v1077 = vadd.f32 %v1075, %v1076
    %v1078 = vmul.f32 %v1077, %v140
    %v1079 = vsub.f32 %v1069, %v1078
    %v1080 = vmul.f32 %v1079, %v1079
    %v1081 = vrot.slane %v1080, 4
    %v1082 = vadd.f32 %v1080, %v1081
    %v1083 = vrot.slane %v1082, 2
    %v1084 = vadd.f32 %v1082, %v1083
    %v1085 = vrot.slane %v1084, 1
    %v1086 = vadd.f32 %v1084, %v1085
    %v1087 = vmul.f32 %v1086, %v140
    %v1088 = vadd.f32 %v1087, 0.001
    %v1089 = vrsqrt.pop %v1088
    %v1090 = vmul.f32 %v1089, %v1088
    %v1091 = vmul.f32 %v1090, %v1089
    %v1092 = vmul.f32 0.5, %v1091
    %v1093 = vsub.f32 1.5, %v1092
    %v1094 = vmul.f32 %v1089, %v1093
    %vm1095 = vweird.f32 %v1088
    %vm1096 = vweird.f32 %v1089
    %vm1097 = vmor %vm1095, %vm1096
    %v1098 = vsel %vm1097, %v1089, %v1094
    %v1099 = vmul.f32 %v1008, %v1098
    %v1100 = vmul.f32 %v1078, %v1099
    %v1101 = vsub.f32 %v1009, %v1100
    %v1102 = vperm.slane %v1099, 0
    %v1103 = vmul.f32 %v1069, %v1102
    %v1104 = vperm.slane %v1101, 0
    %v1105 = vadd.f32 %v1103, %v1104
    %v1106 = vmax.f32 %v1105, 0.0
    %v1107 = vpack.c.bf16 %v1106, %v1106
    %v1108 = vld [vmem:[#allocation4 + $0x1b] sm:$0x1]
    %v1109 = vld [vmem:[#allocation2 + $0x240] sm:$0xf]
    %v1110 = vld [vmem:[#allocation2 + $0x244] sm:$0xf]
    %v1111 = vld [vmem:[#allocation2 + $0x248] sm:$0xf]
    %v1112 = vld [vmem:[#allocation2 + $0x24c] sm:$0xf]
    %v1113 = vld [vmem:[#allocation2 + $0x250] sm:$0xf]
    %v1114 = vld [vmem:[#allocation2 + $0x254] sm:$0xf]
    %v1115 = vld [vmem:[#allocation2 + $0x258] sm:$0xf]
    %v1116 = vld [vmem:[#allocation2 + $0x25c] sm:$0xf]
    %v1117 = vld [vmem:[#allocation2 + $0x260] sm:$0xf]
    %v1118 = vld [vmem:[#allocation2 + $0x264] sm:$0xf]
    %v1119 = vld [vmem:[#allocation2 + $0x268] sm:$0xf]
    %v1120 = vld [vmem:[#allocation2 + $0x26c] sm:$0xf]
    %v1121 = vld [vmem:[#allocation2 + $0x270] sm:$0xf]
    %v1122 = vld [vmem:[#allocation2 + $0x274] sm:$0xf]
    %v1123 = vld [vmem:[#allocation2 + $0x278] sm:$0xf]
    %v1124 = vld [vmem:[#allocation2 + $0x27c] sm:$0xf]
    %v1125 = vperm.slane %v1108, 0
    %v1142 = vunpack.c.l.b16 %v1109
    %v1143 = vunpack.c.l.b16 %v1110
    %v1144 = vunpack.c.l.b16 %v1111
    %v1145 = vunpack.c.l.b16 %v1112
    %v1146 = vunpack.c.l.b16 %v1113
    %v1147 = vunpack.c.l.b16 %v1114
    %v1148 = vunpack.c.l.b16 %v1115
    %v1149 = vunpack.c.l.b16 %v1116
    %v1150 = vunpack.c.l.b16 %v1117
    %v1151 = vunpack.c.l.b16 %v1118
    %v1152 = vunpack.c.l.b16 %v1119
    %v1153 = vunpack.c.l.b16 %v1120
    %v1154 = vunpack.c.l.b16 %v1121
    %v1155 = vunpack.c.l.b16 %v1122
    %v1156 = vunpack.c.l.b16 %v1123
    %v1157 = vunpack.c.l.b16 %v1124
    %v1158 = vpack.c.b16 %v1143, %v1142
    %v1159 = vpack.c.b16 %v1145, %v1144
    %v1160 = vpack.c.b16 %v1147, %v1146
    %v1161 = vpack.c.b16 %v1149, %v1148
    %v1162 = vpack.c.b16 %v1151, %v1150
    %v1163 = vpack.c.b16 %v1153, %v1152
    %v1164 = vpack.c.b16 %v1155, %v1154
    %v1165 = vpack.c.b16 %v1157, %v1156
    %1174 = vmatpush.bf16.msra.mxu0 %v1165
    %1175 = vmatpush.bf16.msra.mxu0 %v1164
    %1176 = vmatpush.bf16.msra.mxu0 %v1163
    %1177 = vmatpush.bf16.msra.mxu0 %v1162
    %1178 = vmatpush.bf16.msra.mxu0 %v1161
    %1179 = vmatpush.bf16.msra.mxu0 %v1160
    %1180 = vmatpush.bf16.msra.mxu0 %v1159
    %1181 = vmatpush.bf16.msra.mxu0 %v1158
    %1182 = vmatmul.bf16.gmra.mxu0 %v1107
    %v1183 = vpop.f32.mrf.mxu0
    %v1184 = vadd.f32 %v1125, %v1183
    %v1185 = vpop.f32.mrf.mxu0
    %1186 = vdwg.mxu0
    %1187 = vst [vmem:[%s3] sm:$0xff] %v1184
    // Predicated region
    $region22: #{autoencoder_forward.1} parent=1 // pred_check
      _
    $region23: #{autoencoder_forward.1} parent=1 // pred_check_branch
      %1189 = sbr.rel (0) target = $region25
    $region24: #{autoencoder_forward.1} parent=1 // pred_region
      _
    $region25: #{autoencoder_forward.1} parent=1 // pred_fallthru
      _
    // Predicated region
    $region26: #{autoencoder_forward.1} parent=1 // pred_check
      _
    $region27: #{autoencoder_forward.1} parent=1 // pred_check_branch
      %1191 = sbr.rel (0) target = $region29
    $region28: #{autoencoder_forward.1} parent=1 // pred_region
      _
    $region29: #{autoencoder_forward.1} parent=1 // pred_fallthru
      _
    %1192 = vsyncpa [#allocation3], 1
    %1193 = vsyncpa [#allocation5], 1

</llo_original>
